<compile_context>
chip_gen: v5e
topology: v5e:2x2
jax: 0.10.0
libtpu: 0.0.40
codegen_flags: <defaults>
</compile_context>

<pallas_src>
import functools

import jax
import jax.numpy as jnp
from jax.experimental import pallas as pl
from jax.experimental.pallas import tpu as pltpu  # noqa: F401  (TPU backend)

_LEAKY = 0.2  # PyG GATConv default negative_slope (Python float: jnp constants
              # must NOT be closed over by the kernel body).


def _gat_fused_kernel(
    x_ref, adj_ref, w1_ref, w1as_ref, w1ad_ref, b1_ref,
    rd_ref, jmask_ref, expand_ref, bdmask_ref, onesbd_ref, invexp_ref,
    eye_ref, w2_ref, w2as_ref, w2ad_ref, b2_ref,
    out_ref,
):
    f32 = jnp.float32
    bf16 = jnp.bfloat16

    x = x_ref[...]                 # [N, Fin]  bf16
    adj = adj_ref[...]             # [N, N]    f32 edge counts

    # ---------------- layer 1: GATConv(in, 8, heads=8) -----------------------
    # Per-head linear (all heads fused, lane-dense) + folded attention
    # projections issued straight off x (no dependence on h_all).
    h_all = jnp.dot(x, w1_ref[...], preferred_element_type=f32)      # [N, HF]
    a_src = jnp.dot(x, w1as_ref[...], preferred_element_type=f32)    # [N, H]
    a_dst = jnp.dot(x, w1ad_ref[...], preferred_element_type=f32)    # [N, H]

    rd = rd_ref[...]               # [H, H*N]  head selector   rd[h, h*N+j] = 1
    jmask = jmask_ref[...]         # [N, H*N]  node selector   jmask[j, h*N+j] = 1

    # Lane-stacked logits, column index c = h*N + j.
    d_exp = jnp.dot(a_dst, rd, preferred_element_type=f32)           # [N, HN]
    t = jnp.dot(a_src, rd, preferred_element_type=f32)               # [N, HN]
    s_flat = jnp.sum(t * jmask, axis=0, keepdims=True)               # [1, HN]
    #   d_exp[i, c] = a_dst[i, h],  s_flat[0, c] = a_src[j, h]  (no transposes)

    # Stabilizer: exact per-(i,h) row max over ALL sources j, so exp(e-m) <= 1.
    s_max = jnp.max(a_src, axis=0, keepdims=True)                    # [1, H]
    m = a_dst + s_max
    m = jnp.maximum(m, _LEAKY * m)                                   # [N, H]
    m_exp = jnp.dot(m, rd, preferred_element_type=f32)               # [N, HN]

    # adj replicated per head block: adj_exp[i, h*N+j] = adj[i, j].
    adj_exp = jnp.dot(adj, jmask, preferred_element_type=f32)        # [N, HN]

    z = d_exp + s_flat
    e = jnp.maximum(z, _LEAKY * z)                                   # LeakyReLU
    # Edge-count weighting == PyG edge softmax incl. parallel-edge multiplicity;
    # self-loops guarantee every row keeps a positive denominator.
    p = jnp.exp(e - m_exp) * adj_exp                                 # [N, HN]
    p_bf = p.astype(bf16)

    # Block-diagonal aggregation: one K = H*N matmul for all 8 heads.
    h_all_bf = h_all.astype(bf16)
    g = jnp.dot(expand_ref[...], h_all_bf, preferred_element_type=f32)  # [HN, HF]
    g = (g * bdmask_ref[...]).astype(bf16)
    h1 = jnp.dot(p_bf, g, preferred_element_type=f32)                # [N, HF]

    denom = jnp.dot(p_bf, onesbd_ref[...], preferred_element_type=f32)  # [N, H]
    inv = pl.reciprocal(denom, approx=True)                          # EUP slot
    inv_exp = jnp.dot(inv, invexp_ref[...], preferred_element_type=f32)  # [N, HF]

    h1 = h1 * inv_exp + b1_ref[...]
    # ELU(alpha=1); min-guard keeps the discarded branch finite.
    h1 = jnp.where(h1 > 0, h1, jnp.exp(jnp.minimum(h1, 0.0)) - 1.0)

    # ---------------- layer 2: GATConv(64, C, heads=1, concat=False) ---------
    h1_bf = h1.astype(bf16)
    h2 = jnp.dot(h1_bf, w2_ref[...], preferred_element_type=f32)     # [N, C]
    # Folded projections (w2as/w2ad = W2 @ att^T) as lane reductions.
    a_s2 = jnp.sum(h1 * w2as_ref[...], axis=-1, keepdims=True)       # [N, 1]
    a_d2 = jnp.sum(h1 * w2ad_ref[...], axis=-1, keepdims=True)       # [N, 1]

    # Transpose-free row broadcast of a_s2: diag-mask + sublane reduce.
    a_s2_row = jnp.sum(a_s2 * eye_ref[...], axis=0, keepdims=True)   # [1, N]
    m2 = a_d2 + jnp.max(a_s2, axis=0, keepdims=True)                 # [N, 1]
    m2 = jnp.maximum(m2, _LEAKY * m2)

    z2 = a_d2 + a_s2_row                                             # [N, N]
    e2 = jnp.maximum(z2, _LEAKY * z2)
    p2 = jnp.exp(e2 - m2) * adj                                      # [N, N]
    denom2 = jnp.sum(p2, axis=-1, keepdims=True)                     # [N, 1]
    o2 = jnp.dot(p2.astype(bf16), h2.astype(bf16),
                 preferred_element_type=f32)                         # [N, C]
    o2 = o2 * pl.reciprocal(denom2, approx=True) + b2_ref[...]

    # ---------------- fused log_softmax epilogue (single [N,C] store) --------
    mx = jnp.max(o2, axis=-1, keepdims=True)
    s = o2 - mx
    lse = jnp.log(jnp.sum(jnp.exp(s), axis=-1, keepdims=True))
    out_ref[...] = s - lse


def gat_forward(x, adj, params, *, out_channels, heads=8, hidden=8):
    """Full GAT forward: x [N, Fin], adj [N, N] edge counts -> log-probs [N, C]."""
    N, _ = x.shape
    hf = heads * hidden
    f32 = jnp.float32
    bf16 = jnp.bfloat16

    eye_h = jnp.eye(heads, dtype=f32)
    eye_n = jnp.eye(N, dtype=f32)

    # Fold per-head attention projections into W1:
    #   a_src = x @ (W1 @ asrc_blockdiag),   asrc_bd[h*F+f, h'] = att_src1[h,f]*d(h,h')
    asrc_bd = (params["att_src1"].astype(f32)[:, :, None]
               * eye_h[:, None, :]).reshape(hf, heads)
    adst_bd = (params["att_dst1"].astype(f32)[:, :, None]
               * eye_h[:, None, :]).reshape(hf, heads)
    w1 = params["w1"].astype(f32)
    w1_asrc = w1 @ asrc_bd                                  # [Fin, H]
    w1_adst = w1 @ adst_bd                                  # [Fin, H]

    # Constant 0/1 selector / mask matrices for the lane-stacked head layout
    # (column c = h*N + j).  jit-time constants.
    rd = jnp.repeat(eye_h, N, axis=1)                       # [H, HN]
    jmask = jnp.tile(eye_n, (1, heads))                     # [N, HN]
    expand = jnp.tile(eye_n, (heads, 1))                    # [HN, N]
    bd_mask = jnp.repeat(jnp.repeat(eye_h, N, axis=0), hidden, axis=1)  # [HN, HF]
    onesbd = jnp.repeat(eye_h, N, axis=0)                   # [HN, H]
    inv_expand = jnp.repeat(eye_h, hidden, axis=1)          # [H, HF]

    # Layer-2 folded projections (independent of h2).
    w2 = params["w2"].astype(f32)                           # [HF, C]
    w2_asrc = (w2 @ params["att_src2"].astype(f32).reshape(out_channels, 1)
               ).reshape(1, hf)
    w2_adst = (w2 @ params["att_dst2"].astype(f32).reshape(out_channels, 1)
               ).reshape(1, hf)

    # No grid: the whole problem fits in VMEM on every TPU generation; default
    # BlockSpecs map each array fully into VMEM.
    return pl.pallas_call(
        _gat_fused_kernel,
        out_shape=jax.ShapeDtypeStruct((N, out_channels), f32),
    )(
        x.astype(bf16),
        adj.astype(f32),
        w1.astype(bf16),
        w1_asrc.astype(bf16),
        w1_adst.astype(bf16),
        params["b1"].astype(f32).reshape(1, hf),
        rd,
        jmask,
        expand.astype(bf16),
        bd_mask,
        onesbd.astype(bf16),
        inv_expand,
        eye_n,
        w2.astype(bf16),
        w2_asrc,
        w2_adst,
        params["b2"].astype(f32).reshape(1, out_channels),
    )


def gat_reference(x, adj, params, *, out_channels, heads=8, hidden=8):
    """Pure-JAX f32 reference (dense-adjacency PyG semantics) for validation."""
    f32 = jnp.float32
    x = x.astype(f32)
    adj = adj.astype(f32)
    N = x.shape[0]
    leaky = lambda v: jnp.where(v >= 0, v, _LEAKY * v)

    h = (x @ params["w1"].astype(f32)).reshape(N, heads, hidden)
    a_src = jnp.einsum("nhf,hf->nh", h, params["att_src1"].astype(f32))
    a_dst = jnp.einsum("nhf,hf->nh", h, params["att_dst1"].astype(f32))
    e = leaky(a_dst[:, None, :] + a_src[None, :, :])        # [i, j, H]
    e = jnp.where((adj > 0)[:, :, None], e, -1e30)
    e = e - jnp.max(e, axis=1, keepdims=True)
    p = jnp.exp(e) * adj[:, :, None]
    alpha = p / jnp.sum(p, axis=1, keepdims=True)
    h1 = jnp.einsum("ijh,jhf->ihf", alpha, h).reshape(N, heads * hidden)
    h1 = h1 + params["b1"].astype(f32)
    h1 = jnp.where(h1 > 0, h1, jnp.exp(jnp.minimum(h1, 0.0)) - 1.0)  # ELU

    h2 = h1 @ params["w2"].astype(f32)
    as2 = h2 @ params["att_src2"].astype(f32).reshape(out_channels)
    ad2 = h2 @ params["att_dst2"].astype(f32).reshape(out_channels)
    e2 = leaky(ad2[:, None] + as2[None, :])
    e2 = jnp.where(adj > 0, e2, -1e30)
    e2 = e2 - jnp.max(e2, axis=1, keepdims=True)
    p2 = jnp.exp(e2) * adj
    alpha2 = p2 / jnp.sum(p2, axis=1, keepdims=True)
    o2 = alpha2 @ h2 + params["b2"].astype(f32)
    return jax.nn.log_softmax(o2, axis=-1)


def build_dense_adj(edge_index, num_nodes):
    """adj[i, j] = #edges j -> i after PyG remove_self_loops + add_self_loops."""
    src, dst = edge_index[0], edge_index[1]
    not_loop = (src != dst).astype(jnp.float32)
    adj = jnp.zeros((num_nodes, num_nodes), jnp.float32)
    adj = adj.at[dst, src].add(not_loop)
    return adj + jnp.eye(num_nodes, dtype=jnp.float32)


if __name__ == "__main__":
    key = jax.random.PRNGKey(0)
    ks = jax.random.split(key, 10)

    N = 32                 # nodes
    in_channels = 16
    out_channels = 7
    hidden = 8
    heads = 8
    n_edges = 96

    x = jax.random.normal(ks[0], (N, in_channels), jnp.float32)
    src = jax.random.randint(ks[1], (n_edges,), 0, N)
    dst = jax.random.randint(ks[2], (n_edges,), 0, N)
    edge_index = jnp.stack([src, dst]).astype(jnp.int32)   # [2, E], PyG layout

    def glorot(k, shape):
        fan_in, fan_out = shape[0], shape[-1]
        lim = jnp.sqrt(6.0 / (fan_in + fan_out))
        return jax.random.uniform(k, shape, jnp.float32, -lim, lim)

    params = {
        # GATConv(in_channels, 8, heads=8): lin W, att_src/att_dst [H, 8], bias [64]
        "w1": glorot(ks[3], (in_channels, heads * hidden)),
        "att_src1": glorot(ks[4], (heads, hidden)),
        "att_dst1": glorot(ks[5], (heads, hidden)),
        "b1": jnp.zeros((heads * hidden,), jnp.float32),
        # GATConv(64, out_channels, heads=1, concat=False)
        "w2": glorot(ks[6], (heads * hidden, out_channels)),
        "att_src2": glorot(ks[7], (1, out_channels)),
        "att_dst2": glorot(ks[8], (1, out_channels)),
        "b2": jnp.zeros((out_channels,), jnp.float32),
    }

    adj = build_dense_adj(edge_index, N)

    fwd = jax.jit(functools.partial(gat_forward, out_channels=out_channels,
                                    heads=heads, hidden=hidden))
    out = fwd(x, adj, params)
    jax.block_until_ready(out)

    ref = gat_reference(x, adj, params, out_channels=out_channels,
                        heads=heads, hidden=hidden)

    assert out.shape == (N, out_channels), out.shape
    assert bool(jnp.all(jnp.isfinite(out)))
    # rows of log_softmax must exp-sum to 1 (exact epilogue)
    assert bool(jnp.allclose(jnp.sum(jnp.exp(out), axis=-1), 1.0, atol=1e-4))
    # loose tolerance covers bf16 MXU operands + approx reciprocal; a structural
    # bug would be O(1) off.
    max_err = float(jnp.max(jnp.abs(out - ref)))
    assert bool(jnp.allclose(out, ref, rtol=5e-2, atol=2e-1)), max_err
    print("KERNEL_OK")
</pallas_src>

<mosaic_0001>
module attributes {stable_mosaic.version = 11 : i64} {
  func.func @_gat_fused_kernel(%arg0: memref<32x16xbf16, #tpu.memory_space<vmem>>, %arg1: memref<32x32xf32, #tpu.memory_space<vmem>>, %arg2: memref<16x64xbf16, #tpu.memory_space<vmem>>, %arg3: memref<16x8xbf16, #tpu.memory_space<vmem>>, %arg4: memref<16x8xbf16, #tpu.memory_space<vmem>>, %arg5: memref<1x64xf32, #tpu.memory_space<vmem>>, %arg6: memref<8x256xf32, #tpu.memory_space<vmem>>, %arg7: memref<32x256xf32, #tpu.memory_space<vmem>>, %arg8: memref<256x32xbf16, #tpu.memory_space<vmem>>, %arg9: memref<256x64xf32, #tpu.memory_space<vmem>>, %arg10: memref<256x8xbf16, #tpu.memory_space<vmem>>, %arg11: memref<8x64xf32, #tpu.memory_space<vmem>>, %arg12: memref<32x32xf32, #tpu.memory_space<vmem>>, %arg13: memref<64x7xbf16, #tpu.memory_space<vmem>>, %arg14: memref<1x64xf32, #tpu.memory_space<vmem>>, %arg15: memref<1x64xf32, #tpu.memory_space<vmem>>, %arg16: memref<1x7xf32, #tpu.memory_space<vmem>>, %arg17: memref<32x7xf32, #tpu.memory_space<vmem>>) attributes {dimension_semantics = [], scalar_prefetch = 0 : i64, scratch_operands = 0 : i64, tpu.core_type = #tpu.core_type<tc>} {
    %c0 = arith.constant 0 : index
    %c0_0 = arith.constant 0 : index
    %0 = vector.load %arg0[%c0, %c0_0] : memref<32x16xbf16, #tpu.memory_space<vmem>>, vector<32x16xbf16>
    %c0_1 = arith.constant 0 : index
    %c0_2 = arith.constant 0 : index
    %1 = vector.load %arg1[%c0_1, %c0_2] : memref<32x32xf32, #tpu.memory_space<vmem>>, vector<32x32xf32>
    %c0_3 = arith.constant 0 : index
    %c0_4 = arith.constant 0 : index
    %2 = vector.load %arg2[%c0_3, %c0_4] : memref<16x64xbf16, #tpu.memory_space<vmem>>, vector<16x64xbf16>
    %cst = arith.constant dense<0.000000e+00> : vector<32x64xf32>
    %3 = tpu.matmul %0, %2, %cst {dimension_numbers = #tpu.dot_dimension_numbers<[1], [0], [0], [1], [0, 0, 1, 1], [], []>} : vector<32x16xbf16>, vector<16x64xbf16>, vector<32x64xf32> -> vector<32x64xf32>
    %c0_5 = arith.constant 0 : index
    %c0_6 = arith.constant 0 : index
    %4 = vector.load %arg3[%c0_5, %c0_6] : memref<16x8xbf16, #tpu.memory_space<vmem>>, vector<16x8xbf16>
    %cst_7 = arith.constant dense<0.000000e+00> : vector<32x8xf32>
    %5 = tpu.matmul %0, %4, %cst_7 {dimension_numbers = #tpu.dot_dimension_numbers<[1], [0], [0], [1], [0, 0, 1, 1], [], []>} : vector<32x16xbf16>, vector<16x8xbf16>, vector<32x8xf32> -> vector<32x8xf32>
    %c0_8 = arith.constant 0 : index
    %c0_9 = arith.constant 0 : index
    %6 = vector.load %arg4[%c0_8, %c0_9] : memref<16x8xbf16, #tpu.memory_space<vmem>>, vector<16x8xbf16>
    %cst_10 = arith.constant dense<0.000000e+00> : vector<32x8xf32>
    %7 = tpu.matmul %0, %6, %cst_10 {dimension_numbers = #tpu.dot_dimension_numbers<[1], [0], [0], [1], [0, 0, 1, 1], [], []>} : vector<32x16xbf16>, vector<16x8xbf16>, vector<32x8xf32> -> vector<32x8xf32>
    %c0_11 = arith.constant 0 : index
    %c0_12 = arith.constant 0 : index
    %8 = vector.load %arg6[%c0_11, %c0_12] : memref<8x256xf32, #tpu.memory_space<vmem>>, vector<8x256xf32>
    %c0_13 = arith.constant 0 : index
    %c0_14 = arith.constant 0 : index
    %9 = vector.load %arg7[%c0_13, %c0_14] : memref<32x256xf32, #tpu.memory_space<vmem>>, vector<32x256xf32>
    %cst_15 = arith.constant dense<0.000000e+00> : vector<32x256xf32>
    %10 = tpu.matmul %7, %8, %cst_15 {dimension_numbers = #tpu.dot_dimension_numbers<[1], [0], [0], [1], [0, 0, 1, 1], [], []>} : vector<32x8xf32>, vector<8x256xf32>, vector<32x256xf32> -> vector<32x256xf32>
    %cst_16 = arith.constant dense<0.000000e+00> : vector<32x256xf32>
    %11 = tpu.matmul %5, %8, %cst_16 {dimension_numbers = #tpu.dot_dimension_numbers<[1], [0], [0], [1], [0, 0, 1, 1], [], []>} : vector<32x8xf32>, vector<8x256xf32>, vector<32x256xf32> -> vector<32x256xf32>
    %12 = arith.mulf %11, %9 : vector<32x256xf32>
    %cst_17 = arith.constant dense<0.000000e+00> : vector<256xf32>
    %13 = vector.multi_reduction <add>, %12, %cst_17 [0] : vector<32x256xf32> to vector<256xf32>
    %14 = vector.shape_cast %13 : vector<256xf32> to vector<1x256xf32>
    %cst_18 = arith.constant dense<0xFF800000> : vector<8xf32>
    %15 = vector.multi_reduction <maximumf>, %5, %cst_18 [0] : vector<32x8xf32> to vector<8xf32>
    %16 = vector.shape_cast %15 : vector<8xf32> to vector<1x8xf32>
    %17 = vector.broadcast %16 : vector<1x8xf32> to vector<32x8xf32>
    %18 = arith.addf %7, %17 : vector<32x8xf32>
    %cst_19 = arith.constant 2.000000e-01 : f32
    %19 = vector.broadcast %cst_19 : f32 to vector<32x8xf32>
    %20 = arith.mulf %19, %18 : vector<32x8xf32>
    %21 = arith.maximumf %18, %20 : vector<32x8xf32>
    %cst_20 = arith.constant dense<0.000000e+00> : vector<32x256xf32>
    %22 = tpu.matmul %21, %8, %cst_20 {dimension_numbers = #tpu.dot_dimension_numbers<[1], [0], [0], [1], [0, 0, 1, 1], [], []>} : vector<32x8xf32>, vector<8x256xf32>, vector<32x256xf32> -> vector<32x256xf32>
    %cst_21 = arith.constant dense<0.000000e+00> : vector<32x256xf32>
    %23 = tpu.matmul %1, %9, %cst_21 {dimension_numbers = #tpu.dot_dimension_numbers<[1], [0], [0], [1], [0, 0, 1, 1], [], []>} : vector<32x32xf32>, vector<32x256xf32>, vector<32x256xf32> -> vector<32x256xf32>
    %24 = vector.broadcast %14 : vector<1x256xf32> to vector<32x256xf32>
    %25 = arith.addf %10, %24 : vector<32x256xf32>
    %cst_22 = arith.constant 2.000000e-01 : f32
    %26 = vector.broadcast %cst_22 : f32 to vector<32x256xf32>
    %27 = arith.mulf %26, %25 : vector<32x256xf32>
    %28 = arith.maximumf %25, %27 : vector<32x256xf32>
    %29 = arith.subf %28, %22 : vector<32x256xf32>
    %30 = math.exp %29 : vector<32x256xf32>
    %31 = arith.mulf %30, %23 : vector<32x256xf32>
    %32 = arith.truncf %31 : vector<32x256xf32> to vector<32x256xbf16>
    %33 = arith.truncf %3 : vector<32x64xf32> to vector<32x64xbf16>
    %c0_23 = arith.constant 0 : index
    %c0_24 = arith.constant 0 : index
    %34 = vector.load %arg8[%c0_23, %c0_24] : memref<256x32xbf16, #tpu.memory_space<vmem>>, vector<256x32xbf16>
    %cst_25 = arith.constant dense<0.000000e+00> : vector<256x64xf32>
    %35 = tpu.matmul %34, %33, %cst_25 {dimension_numbers = #tpu.dot_dimension_numbers<[1], [0], [0], [1], [0, 0, 1, 1], [], []>} : vector<256x32xbf16>, vector<32x64xbf16>, vector<256x64xf32> -> vector<256x64xf32>
    %c0_26 = arith.constant 0 : index
    %c0_27 = arith.constant 0 : index
    %36 = vector.load %arg9[%c0_26, %c0_27] : memref<256x64xf32, #tpu.memory_space<vmem>>, vector<256x64xf32>
    %37 = arith.mulf %35, %36 : vector<256x64xf32>
    %38 = arith.truncf %37 : vector<256x64xf32> to vector<256x64xbf16>
    %cst_28 = arith.constant dense<0.000000e+00> : vector<32x64xf32>
    %39 = tpu.matmul %32, %38, %cst_28 {dimension_numbers = #tpu.dot_dimension_numbers<[1], [0], [0], [1], [0, 0, 1, 1], [], []>} : vector<32x256xbf16>, vector<256x64xbf16>, vector<32x64xf32> -> vector<32x64xf32>
    %c0_29 = arith.constant 0 : index
    %c0_30 = arith.constant 0 : index
    %40 = vector.load %arg10[%c0_29, %c0_30] : memref<256x8xbf16, #tpu.memory_space<vmem>>, vector<256x8xbf16>
    %cst_31 = arith.constant dense<0.000000e+00> : vector<32x8xf32>
    %41 = tpu.matmul %32, %40, %cst_31 {dimension_numbers = #tpu.dot_dimension_numbers<[1], [0], [0], [1], [0, 0, 1, 1], [], []>} : vector<32x256xbf16>, vector<256x8xbf16>, vector<32x8xf32> -> vector<32x8xf32>
    %42 = tpu.reciprocal %41 {approx = true} : vector<32x8xf32> -> vector<32x8xf32>
    %c0_32 = arith.constant 0 : index
    %c0_33 = arith.constant 0 : index
    %43 = vector.load %arg11[%c0_32, %c0_33] : memref<8x64xf32, #tpu.memory_space<vmem>>, vector<8x64xf32>
    %cst_34 = arith.constant dense<0.000000e+00> : vector<32x64xf32>
    %44 = tpu.matmul %42, %43, %cst_34 {dimension_numbers = #tpu.dot_dimension_numbers<[1], [0], [0], [1], [0, 0, 1, 1], [], []>} : vector<32x8xf32>, vector<8x64xf32>, vector<32x64xf32> -> vector<32x64xf32>
    %45 = arith.mulf %39, %44 : vector<32x64xf32>
    %c0_35 = arith.constant 0 : index
    %c0_36 = arith.constant 0 : index
    %46 = vector.load %arg5[%c0_35, %c0_36] : memref<1x64xf32, #tpu.memory_space<vmem>>, vector<1x64xf32>
    %47 = vector.broadcast %46 : vector<1x64xf32> to vector<32x64xf32>
    %48 = arith.addf %45, %47 : vector<32x64xf32>
    %cst_37 = arith.constant 0.000000e+00 : f32
    %49 = vector.broadcast %cst_37 : f32 to vector<32x64xf32>
    %50 = arith.cmpf ogt, %48, %49 : vector<32x64xf32>
    %cst_38 = arith.constant 0.000000e+00 : f32
    %51 = vector.broadcast %cst_38 : f32 to vector<32x64xf32>
    %52 = arith.minimumf %48, %51 : vector<32x64xf32>
    %53 = math.exp %52 : vector<32x64xf32>
    %cst_39 = arith.constant 1.000000e+00 : f32
    %54 = vector.broadcast %cst_39 : f32 to vector<32x64xf32>
    %55 = arith.subf %53, %54 : vector<32x64xf32>
    %56 = arith.select %50, %48, %55 : vector<32x64xi1>, vector<32x64xf32>
    %57 = arith.truncf %56 : vector<32x64xf32> to vector<32x64xbf16>
    %c0_40 = arith.constant 0 : index
    %c0_41 = arith.constant 0 : index
    %58 = vector.load %arg13[%c0_40, %c0_41] : memref<64x7xbf16, #tpu.memory_space<vmem>>, vector<64x7xbf16>
    %cst_42 = arith.constant dense<0.000000e+00> : vector<32x7xf32>
    %59 = tpu.matmul %57, %58, %cst_42 {dimension_numbers = #tpu.dot_dimension_numbers<[1], [0], [0], [1], [0, 0, 1, 1], [], []>} : vector<32x64xbf16>, vector<64x7xbf16>, vector<32x7xf32> -> vector<32x7xf32>
    %c0_43 = arith.constant 0 : index
    %c0_44 = arith.constant 0 : index
    %60 = vector.load %arg14[%c0_43, %c0_44] : memref<1x64xf32, #tpu.memory_space<vmem>>, vector<1x64xf32>
    %61 = vector.broadcast %60 : vector<1x64xf32> to vector<32x64xf32>
    %62 = arith.mulf %56, %61 : vector<32x64xf32>
    %cst_45 = arith.constant dense<0.000000e+00> : vector<32xf32>
    %63 = vector.multi_reduction <add>, %62, %cst_45 [1] : vector<32x64xf32> to vector<32xf32>
    %64 = vector.shape_cast %63 : vector<32xf32> to vector<32x1xf32>
    %c0_46 = arith.constant 0 : index
    %c0_47 = arith.constant 0 : index
    %65 = vector.load %arg15[%c0_46, %c0_47] : memref<1x64xf32, #tpu.memory_space<vmem>>, vector<1x64xf32>
    %66 = vector.broadcast %65 : vector<1x64xf32> to vector<32x64xf32>
    %67 = arith.mulf %56, %66 : vector<32x64xf32>
    %cst_48 = arith.constant dense<0.000000e+00> : vector<32xf32>
    %68 = vector.multi_reduction <add>, %67, %cst_48 [1] : vector<32x64xf32> to vector<32xf32>
    %69 = vector.shape_cast %68 : vector<32xf32> to vector<32x1xf32>
    %c0_49 = arith.constant 0 : index
    %c0_50 = arith.constant 0 : index
    %70 = vector.load %arg12[%c0_49, %c0_50] : memref<32x32xf32, #tpu.memory_space<vmem>>, vector<32x32xf32>
    %71 = vector.broadcast %64 : vector<32x1xf32> to vector<32x32xf32>
    %72 = arith.mulf %71, %70 : vector<32x32xf32>
    %cst_51 = arith.constant dense<0.000000e+00> : vector<32xf32>
    %73 = vector.multi_reduction <add>, %72, %cst_51 [0] : vector<32x32xf32> to vector<32xf32>
    %74 = vector.shape_cast %73 : vector<32xf32> to vector<1x32xf32>
    %cst_52 = arith.constant dense<0xFF800000> : vector<1xf32>
    %75 = vector.multi_reduction <maximumf>, %64, %cst_52 [0] : vector<32x1xf32> to vector<1xf32>
    %76 = vector.shape_cast %75 : vector<1xf32> to vector<1x1xf32>
    %77 = vector.broadcast %76 : vector<1x1xf32> to vector<32x1xf32>
    %78 = arith.addf %69, %77 : vector<32x1xf32>
    %cst_53 = arith.constant 2.000000e-01 : f32
    %79 = vector.broadcast %cst_53 : f32 to vector<32x1xf32>
    %80 = arith.mulf %79, %78 : vector<32x1xf32>
    %81 = arith.maximumf %78, %80 : vector<32x1xf32>
    %82 = vector.broadcast %69 : vector<32x1xf32> to vector<32x32xf32>
    %83 = vector.broadcast %74 : vector<1x32xf32> to vector<32x32xf32>
    %84 = arith.addf %82, %83 : vector<32x32xf32>
    %cst_54 = arith.constant 2.000000e-01 : f32
    %85 = vector.broadcast %cst_54 : f32 to vector<32x32xf32>
    %86 = arith.mulf %85, %84 : vector<32x32xf32>
    %87 = arith.maximumf %84, %86 : vector<32x32xf32>
    %88 = vector.broadcast %81 : vector<32x1xf32> to vector<32x32xf32>
    %89 = arith.subf %87, %88 : vector<32x32xf32>
    %90 = math.exp %89 : vector<32x32xf32>
    %91 = arith.mulf %90, %1 : vector<32x32xf32>
    %cst_55 = arith.constant dense<0.000000e+00> : vector<32xf32>
    %92 = vector.multi_reduction <add>, %91, %cst_55 [1] : vector<32x32xf32> to vector<32xf32>
    %93 = vector.shape_cast %92 : vector<32xf32> to vector<32x1xf32>
    %94 = arith.truncf %91 : vector<32x32xf32> to vector<32x32xbf16>
    %95 = arith.truncf %59 : vector<32x7xf32> to vector<32x7xbf16>
    %cst_56 = arith.constant dense<0.000000e+00> : vector<32x7xf32>
    %96 = tpu.matmul %94, %95, %cst_56 {dimension_numbers = #tpu.dot_dimension_numbers<[1], [0], [0], [1], [0, 0, 1, 1], [], []>} : vector<32x32xbf16>, vector<32x7xbf16>, vector<32x7xf32> -> vector<32x7xf32>
    %97 = tpu.reciprocal %93 {approx = true} : vector<32x1xf32> -> vector<32x1xf32>
    %98 = vector.broadcast %97 : vector<32x1xf32> to vector<32x7xf32>
    %99 = arith.mulf %96, %98 : vector<32x7xf32>
    %c0_57 = arith.constant 0 : index
    %c0_58 = arith.constant 0 : index
    %100 = vector.load %arg16[%c0_57, %c0_58] : memref<1x7xf32, #tpu.memory_space<vmem>>, vector<1x7xf32>
    %101 = vector.broadcast %100 : vector<1x7xf32> to vector<32x7xf32>
    %102 = arith.addf %99, %101 : vector<32x7xf32>
    %cst_59 = arith.constant dense<0xFF800000> : vector<32xf32>
    %103 = vector.multi_reduction <maximumf>, %102, %cst_59 [1] : vector<32x7xf32> to vector<32xf32>
    %104 = vector.shape_cast %103 : vector<32xf32> to vector<32x1xf32>
    %105 = vector.broadcast %104 : vector<32x1xf32> to vector<32x7xf32>
    %106 = arith.subf %102, %105 : vector<32x7xf32>
    %107 = math.exp %106 : vector<32x7xf32>
    %cst_60 = arith.constant dense<0.000000e+00> : vector<32xf32>
    %108 = vector.multi_reduction <add>, %107, %cst_60 [1] : vector<32x7xf32> to vector<32xf32>
    %109 = vector.shape_cast %108 : vector<32xf32> to vector<32x1xf32>
    %110 = math.log %109 : vector<32x1xf32>
    %111 = vector.broadcast %110 : vector<32x1xf32> to vector<32x7xf32>
    %112 = arith.subf %106, %111 : vector<32x7xf32>
    %c0_61 = arith.constant 0 : index
    %c0_62 = arith.constant 0 : index
    %113 = vector.load %arg17[%c0_61, %c0_62] : memref<32x7xf32, #tpu.memory_space<vmem>>, vector<32x7xf32>
    tpu.vector_store %arg17[%c0_61, %c0_62], %112 {strides = array<i32>} : memref<32x7xf32, #tpu.memory_space<vmem>>, vector<32x7xf32>,
    return
  }
}

</mosaic_0001>

<llo_original>
// kernel: tile.14
$region0: #{tile.14}
  %s0 = inlined_call_operand.vmem [shape: f32[32,8,32], index: 0, kind: input, shape index: {}]
  %s1 = inlined_call_operand.vmem [shape: f32[32,256], index: 1, kind: output, shape index: {}]
  %v2 = vld [vmem:[%s0] ss:$4 sm:$0xff]
  %vm3 = vcmask 261120
  %4 = vst.msk [vmem:[%s1] ss:$8 sm:$0x3] %vm3, %v2
  %s5 = scalar_lea.vmem %s1, 4294967281
  %6 = vst.msk [vmem:[%s5] ss:$8 sm:$0xc] %vm3, %v2
  %s7 = scalar_lea.vmem %s1, 4294967266
  %8 = vst.msk [vmem:[%s7] ss:$8 sm:$0x30] %vm3, %v2
  %s9 = scalar_lea.vmem %s1, 4294967251
  %10 = vst.msk [vmem:[%s9] ss:$8 sm:$0xc0] %vm3, %v2
  %s11 = scalar_lea.vmem %s0, 32
  %v12 = vld [vmem:[%s11] ss:$4 sm:$0xff]
  %vm13 = vcmask 261120
  %s14 = scalar_lea.vmem %s1, 4
  %15 = vst.msk [vmem:[%s14] ss:$8 sm:$0x3] %vm13, %v12
  %s16 = scalar_lea.vmem %s1, 4294967285
  %17 = vst.msk [vmem:[%s16] ss:$8 sm:$0xc] %vm13, %v12
  %s18 = scalar_lea.vmem %s1, 4294967270
  %19 = vst.msk [vmem:[%s18] ss:$8 sm:$0x30] %vm13, %v12
  %s20 = scalar_lea.vmem %s1, 4294967255
  %21 = vst.msk [vmem:[%s20] ss:$8 sm:$0xc0] %vm13, %v12
  %s22 = scalar_lea.vmem %s0, 64
  %v23 = vld [vmem:[%s22] ss:$4 sm:$0xff]
  %vm24 = vcmask 261120
  %s25 = scalar_lea.vmem %s1, 16
  %26 = vst.msk [vmem:[%s25] ss:$8 sm:$0x3] %vm24, %v23
  %s27 = scalar_lea.vmem %s1, 1
  %28 = vst.msk [vmem:[%s27] ss:$8 sm:$0xc] %vm24, %v23
  %s29 = scalar_lea.vmem %s1, 4294967282
  %30 = vst.msk [vmem:[%s29] ss:$8 sm:$0x30] %vm24, %v23
  %s31 = scalar_lea.vmem %s1, 4294967267
  %32 = vst.msk [vmem:[%s31] ss:$8 sm:$0xc0] %vm24, %v23
  %s33 = scalar_lea.vmem %s0, 96
  %v34 = vld [vmem:[%s33] ss:$4 sm:$0xff]
  %vm35 = vcmask 261120
  %s36 = scalar_lea.vmem %s1, 20
  %37 = vst.msk [vmem:[%s36] ss:$8 sm:$0x3] %vm35, %v34
  %s38 = scalar_lea.vmem %s1, 5
  %39 = vst.msk [vmem:[%s38] ss:$8 sm:$0xc] %vm35, %v34
  %s40 = scalar_lea.vmem %s1, 4294967286
  %41 = vst.msk [vmem:[%s40] ss:$8 sm:$0x30] %vm35, %v34
  %s42 = scalar_lea.vmem %s1, 4294967271
  %43 = vst.msk [vmem:[%s42] ss:$8 sm:$0xc0] %vm35, %v34
  %s44 = scalar_lea.vmem %s0, 128
  %v45 = vld [vmem:[%s44] ss:$4 sm:$0xff]
  %vm46 = vcmask 261120
  %s47 = scalar_lea.vmem %s1, 32
  %48 = vst.msk [vmem:[%s47] ss:$8 sm:$0x3] %vm46, %v45
  %s49 = scalar_lea.vmem %s1, 17
  %50 = vst.msk [vmem:[%s49] ss:$8 sm:$0xc] %vm46, %v45
  %s51 = scalar_lea.vmem %s1, 2
  %52 = vst.msk [vmem:[%s51] ss:$8 sm:$0x30] %vm46, %v45
  %s53 = scalar_lea.vmem %s1, 4294967283
  %54 = vst.msk [vmem:[%s53] ss:$8 sm:$0xc0] %vm46, %v45
  %s55 = scalar_lea.vmem %s0, 160
  %v56 = vld [vmem:[%s55] ss:$4 sm:$0xff]
  %vm57 = vcmask 261120
  %s58 = scalar_lea.vmem %s1, 36
  %59 = vst.msk [vmem:[%s58] ss:$8 sm:$0x3] %vm57, %v56
  %s60 = scalar_lea.vmem %s1, 21
  %61 = vst.msk [vmem:[%s60] ss:$8 sm:$0xc] %vm57, %v56
  %s62 = scalar_lea.vmem %s1, 6
  %63 = vst.msk [vmem:[%s62] ss:$8 sm:$0x30] %vm57, %v56
  %s64 = scalar_lea.vmem %s1, 4294967287
  %65 = vst.msk [vmem:[%s64] ss:$8 sm:$0xc0] %vm57, %v56
  %s66 = scalar_lea.vmem %s0, 192
  %v67 = vld [vmem:[%s66] ss:$4 sm:$0xff]
  %vm68 = vcmask 261120
  %s69 = scalar_lea.vmem %s1, 48
  %70 = vst.msk [vmem:[%s69] ss:$8 sm:$0x3] %vm68, %v67
  %s71 = scalar_lea.vmem %s1, 33
  %72 = vst.msk [vmem:[%s71] ss:$8 sm:$0xc] %vm68, %v67
  %s73 = scalar_lea.vmem %s1, 18
  %74 = vst.msk [vmem:[%s73] ss:$8 sm:$0x30] %vm68, %v67
  %s75 = scalar_lea.vmem %s1, 3
  %76 = vst.msk [vmem:[%s75] ss:$8 sm:$0xc0] %vm68, %v67
  %s77 = scalar_lea.vmem %s0, 224
  %v78 = vld [vmem:[%s77] ss:$4 sm:$0xff]
  %vm79 = vcmask 261120
  %s80 = scalar_lea.vmem %s1, 52
  %81 = vst.msk [vmem:[%s80] ss:$8 sm:$0x3] %vm79, %v78
  %s82 = scalar_lea.vmem %s1, 37
  %83 = vst.msk [vmem:[%s82] ss:$8 sm:$0xc] %vm79, %v78
  %s84 = scalar_lea.vmem %s1, 22
  %85 = vst.msk [vmem:[%s84] ss:$8 sm:$0x30] %vm79, %v78
  %s86 = scalar_lea.vmem %s1, 7
  %87 = vst.msk [vmem:[%s86] ss:$8 sm:$0xc0] %vm79, %v78
  %s88 = scalar_lea.vmem %s0, 3
  %v89 = vld [vmem:[%s88] ss:$8 sm:$0xf]
  %s90 = scalar_lea.vmem %s0, 3
  %v91 = vld [vmem:[%s90] ss:$8 sm:$0xf0]
  %vm92 = vcmask 1047556
  %v93 = vsel %vm92, %v91, %v89
  %94 = vrot.lane.b32.xlu0 %v93, 96
  %v95 = vpop.permute.xlu0 %94
  %vm96 = vcmask 1048320
  %97 = vst.msk [vmem:[%s1] sm:$0xff] %vm96, %v95
  %s98 = scalar_lea.vmem %s0, 131
  %v99 = vld [vmem:[%s98] ss:$8 sm:$0xf]
  %s100 = scalar_lea.vmem %s0, 131
  %v101 = vld [vmem:[%s100] ss:$8 sm:$0xf0]
  %vm102 = vcmask 1047556
  %v103 = vsel %vm102, %v101, %v99
  %104 = vrot.lane.b32.xlu0 %v103, 96
  %v105 = vpop.permute.xlu0 %104
  %vm106 = vcmask 1048320
  %s107 = scalar_lea.vmem %s1, 32
  %108 = vst.msk [vmem:[%s107] sm:$0xff] %vm106, %v105
  %s109 = scalar_lea.vmem %s0, 7
  %v110 = vld [vmem:[%s109] ss:$8 sm:$0xf]
  %s111 = scalar_lea.vmem %s0, 7
  %v112 = vld [vmem:[%s111] ss:$8 sm:$0xf0]
  %vm113 = vcmask 1047556
  %v114 = vsel %vm113, %v112, %v110
  %115 = vrot.lane.b32.xlu0 %v114, 96
  %v116 = vpop.permute.xlu0 %115
  %vm117 = vcmask 1048320
  %s118 = scalar_lea.vmem %s1, 8
  %119 = vst.msk [vmem:[%s118] sm:$0xff] %vm117, %v116
  %s120 = scalar_lea.vmem %s0, 135
  %v121 = vld [vmem:[%s120] ss:$8 sm:$0xf]
  %s122 = scalar_lea.vmem %s0, 135
  %v123 = vld [vmem:[%s122] ss:$8 sm:$0xf0]
  %vm124 = vcmask 1047556
  %v125 = vsel %vm124, %v123, %v121
  %126 = vrot.lane.b32.xlu0 %v125, 96
  %v127 = vpop.permute.xlu0 %126
  %vm128 = vcmask 1048320
  %s129 = scalar_lea.vmem %s1, 40
  %130 = vst.msk [vmem:[%s129] sm:$0xff] %vm128, %v127
  %s131 = scalar_lea.vmem %s0, 67
  %v132 = vld [vmem:[%s131] ss:$8 sm:$0xf]
  %s133 = scalar_lea.vmem %s0, 67
  %v134 = vld [vmem:[%s133] ss:$8 sm:$0xf0]
  %vm135 = vcmask 1047556
  %v136 = vsel %vm135, %v134, %v132
  %137 = vrot.lane.b32.xlu0 %v136, 96
  %v138 = vpop.permute.xlu0 %137
  %vm139 = vcmask 1048320
  %s140 = scalar_lea.vmem %s1, 16
  %141 = vst.msk [vmem:[%s140] sm:$0xff] %vm139, %v138
  %s142 = scalar_lea.vmem %s0, 195
  %v143 = vld [vmem:[%s142] ss:$8 sm:$0xf]
  %s144 = scalar_lea.vmem %s0, 195
  %v145 = vld [vmem:[%s144] ss:$8 sm:$0xf0]
  %vm146 = vcmask 1047556
  %v147 = vsel %vm146, %v145, %v143
  %148 = vrot.lane.b32.xlu0 %v147, 96
  %v149 = vpop.permute.xlu0 %148
  %vm150 = vcmask 1048320
  %s151 = scalar_lea.vmem %s1, 48
  %152 = vst.msk [vmem:[%s151] sm:$0xff] %vm150, %v149
  %s153 = scalar_lea.vmem %s0, 71
  %v154 = vld [vmem:[%s153] ss:$8 sm:$0xf]
  %s155 = scalar_lea.vmem %s0, 71
  %v156 = vld [vmem:[%s155] ss:$8 sm:$0xf0]
  %vm157 = vcmask 1047556
  %v158 = vsel %vm157, %v156, %v154
  %159 = vrot.lane.b32.xlu0 %v158, 96
  %v160 = vpop.permute.xlu0 %159
  %vm161 = vcmask 1048320
  %s162 = scalar_lea.vmem %s1, 24
  %163 = vst.msk [vmem:[%s162] sm:$0xff] %vm161, %v160
  %s164 = scalar_lea.vmem %s0, 199
  %v165 = vld [vmem:[%s164] ss:$8 sm:$0xf]
  %s166 = scalar_lea.vmem %s0, 199
  %v167 = vld [vmem:[%s166] ss:$8 sm:$0xf0]
  %vm168 = vcmask 1047556
  %v169 = vsel %vm168, %v167, %v165
  %170 = vrot.lane.b32.xlu0 %v169, 96
  %v171 = vpop.permute.xlu0 %170
  %vm172 = vcmask 1048320
  %s173 = scalar_lea.vmem %s1, 56
  %174 = vst.msk [vmem:[%s173] sm:$0xff] %vm172, %v171
  %s175 = scalar_lea.vmem %s0, 2
  %v176 = vld [vmem:[%s175] ss:$8 sm:$0xf]
  %s177 = scalar_lea.vmem %s0, 2
  %v178 = vld [vmem:[%s177] ss:$8 sm:$0xf0]
  %vm179 = vcmask 1047556
  %v180 = vsel %vm179, %v178, %v176
  %181 = vrot.lane.b32.xlu0 %v180, 64
  %v182 = vpop.permute.xlu0 %181
  %vm183 = vcmask 785920
  %184 = vst.msk [vmem:[%s1] sm:$0xff] %vm183, %v182
  %s185 = scalar_lea.vmem %s0, 130
  %v186 = vld [vmem:[%s185] ss:$8 sm:$0xf]
  %s187 = scalar_lea.vmem %s0, 130
  %v188 = vld [vmem:[%s187] ss:$8 sm:$0xf0]
  %vm189 = vcmask 1047556
  %v190 = vsel %vm189, %v188, %v186
  %191 = vrot.lane.b32.xlu0 %v190, 64
  %v192 = vpop.permute.xlu0 %191
  %vm193 = vcmask 785920
  %s194 = scalar_lea.vmem %s1, 32
  %195 = vst.msk [vmem:[%s194] sm:$0xff] %vm193, %v192
  %s196 = scalar_lea.vmem %s0, 6
  %v197 = vld [vmem:[%s196] ss:$8 sm:$0xf]
  %s198 = scalar_lea.vmem %s0, 6
  %v199 = vld [vmem:[%s198] ss:$8 sm:$0xf0]
  %vm200 = vcmask 1047556
  %v201 = vsel %vm200, %v199, %v197
  %202 = vrot.lane.b32.xlu0 %v201, 64
  %v203 = vpop.permute.xlu0 %202
  %vm204 = vcmask 785920
  %s205 = scalar_lea.vmem %s1, 8
  %206 = vst.msk [vmem:[%s205] sm:$0xff] %vm204, %v203
  %s207 = scalar_lea.vmem %s0, 134
  %v208 = vld [vmem:[%s207] ss:$8 sm:$0xf]
  %s209 = scalar_lea.vmem %s0, 134
  %v210 = vld [vmem:[%s209] ss:$8 sm:$0xf0]
  %vm211 = vcmask 1047556
  %v212 = vsel %vm211, %v210, %v208
  %213 = vrot.lane.b32.xlu0 %v212, 64
  %v214 = vpop.permute.xlu0 %213
  %vm215 = vcmask 785920
  %s216 = scalar_lea.vmem %s1, 40
  %217 = vst.msk [vmem:[%s216] sm:$0xff] %vm215, %v214
  %s218 = scalar_lea.vmem %s0, 66
  %v219 = vld [vmem:[%s218] ss:$8 sm:$0xf]
  %s220 = scalar_lea.vmem %s0, 66
  %v221 = vld [vmem:[%s220] ss:$8 sm:$0xf0]
  %vm222 = vcmask 1047556
  %v223 = vsel %vm222, %v221, %v219
  %224 = vrot.lane.b32.xlu0 %v223, 64
  %v225 = vpop.permute.xlu0 %224
  %vm226 = vcmask 785920
  %s227 = scalar_lea.vmem %s1, 16
  %228 = vst.msk [vmem:[%s227] sm:$0xff] %vm226, %v225
  %s229 = scalar_lea.vmem %s0, 194
  %v230 = vld [vmem:[%s229] ss:$8 sm:$0xf]
  %s231 = scalar_lea.vmem %s0, 194
  %v232 = vld [vmem:[%s231] ss:$8 sm:$0xf0]
  %vm233 = vcmask 1047556
  %v234 = vsel %vm233, %v232, %v230
  %235 = vrot.lane.b32.xlu0 %v234, 64
  %v236 = vpop.permute.xlu0 %235
  %vm237 = vcmask 785920
  %s238 = scalar_lea.vmem %s1, 48
  %239 = vst.msk [vmem:[%s238] sm:$0xff] %vm237, %v236
  %s240 = scalar_lea.vmem %s0, 70
  %v241 = vld [vmem:[%s240] ss:$8 sm:$0xf]
  %s242 = scalar_lea.vmem %s0, 70
  %v243 = vld [vmem:[%s242] ss:$8 sm:$0xf0]
  %vm244 = vcmask 1047556
  %v245 = vsel %vm244, %v243, %v241
  %246 = vrot.lane.b32.xlu0 %v245, 64
  %v247 = vpop.permute.xlu0 %246
  %vm248 = vcmask 785920
  %s249 = scalar_lea.vmem %s1, 24
  %250 = vst.msk [vmem:[%s249] sm:$0xff] %vm248, %v247
  %s251 = scalar_lea.vmem %s0, 198
  %v252 = vld [vmem:[%s251] ss:$8 sm:$0xf]
  %s253 = scalar_lea.vmem %s0, 198
  %v254 = vld [vmem:[%s253] ss:$8 sm:$0xf0]
  %vm255 = vcmask 1047556
  %v256 = vsel %vm255, %v254, %v252
  %257 = vrot.lane.b32.xlu0 %v256, 64
  %v258 = vpop.permute.xlu0 %257
  %vm259 = vcmask 785920
  %s260 = scalar_lea.vmem %s1, 56
  %261 = vst.msk [vmem:[%s260] sm:$0xff] %vm259, %v258
  %s262 = scalar_lea.vmem %s0, 1
  %v263 = vld [vmem:[%s262] ss:$8 sm:$0xf]
  %s264 = scalar_lea.vmem %s0, 1
  %v265 = vld [vmem:[%s264] ss:$8 sm:$0xf0]
  %vm266 = vcmask 1047556
  %v267 = vsel %vm266, %v265, %v263
  %268 = vrot.lane.b32.xlu0 %v267, 32
  %v269 = vpop.permute.xlu0 %268
  %vm270 = vcmask 523520
  %271 = vst.msk [vmem:[%s1] sm:$0xff] %vm270, %v269
  %s272 = scalar_lea.vmem %s0, 129
  %v273 = vld [vmem:[%s272] ss:$8 sm:$0xf]
  %s274 = scalar_lea.vmem %s0, 129
  %v275 = vld [vmem:[%s274] ss:$8 sm:$0xf0]
  %vm276 = vcmask 1047556
  %v277 = vsel %vm276, %v275, %v273
  %278 = vrot.lane.b32.xlu0 %v277, 32
  %v279 = vpop.permute.xlu0 %278
  %vm280 = vcmask 523520
  %s281 = scalar_lea.vmem %s1, 32
  %282 = vst.msk [vmem:[%s281] sm:$0xff] %vm280, %v279
  %s283 = scalar_lea.vmem %s0, 5
  %v284 = vld [vmem:[%s283] ss:$8 sm:$0xf]
  %s285 = scalar_lea.vmem %s0, 5
  %v286 = vld [vmem:[%s285] ss:$8 sm:$0xf0]
  %vm287 = vcmask 1047556
  %v288 = vsel %vm287, %v286, %v284
  %289 = vrot.lane.b32.xlu0 %v288, 32
  %v290 = vpop.permute.xlu0 %289
  %vm291 = vcmask 523520
  %s292 = scalar_lea.vmem %s1, 8
  %293 = vst.msk [vmem:[%s292] sm:$0xff] %vm291, %v290
  %s294 = scalar_lea.vmem %s0, 133
  %v295 = vld [vmem:[%s294] ss:$8 sm:$0xf]
  %s296 = scalar_lea.vmem %s0, 133
  %v297 = vld [vmem:[%s296] ss:$8 sm:$0xf0]
  %vm298 = vcmask 1047556
  %v299 = vsel %vm298, %v297, %v295
  %300 = vrot.lane.b32.xlu0 %v299, 32
  %v301 = vpop.permute.xlu0 %300
  %vm302 = vcmask 523520
  %s303 = scalar_lea.vmem %s1, 40
  %304 = vst.msk [vmem:[%s303] sm:$0xff] %vm302, %v301
  %s305 = scalar_lea.vmem %s0, 65
  %v306 = vld [vmem:[%s305] ss:$8 sm:$0xf]
  %s307 = scalar_lea.vmem %s0, 65
  %v308 = vld [vmem:[%s307] ss:$8 sm:$0xf0]
  %vm309 = vcmask 1047556
  %v310 = vsel %vm309, %v308, %v306
  %311 = vrot.lane.b32.xlu0 %v310, 32
  %v312 = vpop.permute.xlu0 %311
  %vm313 = vcmask 523520
  %s314 = scalar_lea.vmem %s1, 16
  %315 = vst.msk [vmem:[%s314] sm:$0xff] %vm313, %v312
  %s316 = scalar_lea.vmem %s0, 193
  %v317 = vld [vmem:[%s316] ss:$8 sm:$0xf]
  %s318 = scalar_lea.vmem %s0, 193
  %v319 = vld [vmem:[%s318] ss:$8 sm:$0xf0]
  %vm320 = vcmask 1047556
  %v321 = vsel %vm320, %v319, %v317
  %322 = vrot.lane.b32.xlu0 %v321, 32
  %v323 = vpop.permute.xlu0 %322
  %vm324 = vcmask 523520
  %s325 = scalar_lea.vmem %s1, 48
  %326 = vst.msk [vmem:[%s325] sm:$0xff] %vm324, %v323
  %s327 = scalar_lea.vmem %s0, 69
  %v328 = vld [vmem:[%s327] ss:$8 sm:$0xf]
  %s329 = scalar_lea.vmem %s0, 69
  %v330 = vld [vmem:[%s329] ss:$8 sm:$0xf0]
  %vm331 = vcmask 1047556
  %v332 = vsel %vm331, %v330, %v328
  %333 = vrot.lane.b32.xlu0 %v332, 32
  %v334 = vpop.permute.xlu0 %333
  %vm335 = vcmask 523520
  %s336 = scalar_lea.vmem %s1, 24
  %337 = vst.msk [vmem:[%s336] sm:$0xff] %vm335, %v334
  %s338 = scalar_lea.vmem %s0, 197
  %v339 = vld [vmem:[%s338] ss:$8 sm:$0xf]
  %s340 = scalar_lea.vmem %s0, 197
  %v341 = vld [vmem:[%s340] ss:$8 sm:$0xf0]
  %vm342 = vcmask 1047556
  %v343 = vsel %vm342, %v341, %v339
  %344 = vrot.lane.b32.xlu0 %v343, 32
  %v345 = vpop.permute.xlu0 %344
  %vm346 = vcmask 523520
  %s347 = scalar_lea.vmem %s1, 56
  %348 = vst.msk [vmem:[%s347] sm:$0xff] %vm346, %v345

// kernel: gat_forward.1
$region0: #{gat_forward.1}
  #allocation0 [shape = 'u32[]', space=smem, size = 0x4, offset = 0x4, fixed_abs, tag = 'smem constant byte address 0x4 - core index']
  #allocation1 [shape = 'u32[72,128]{1,0:T(1,128)}', space=vmem, size = 0x9000, scoped, tag = 'internal scratch']
  %s0 = inlined_call_operand.vmem [shape: bf16[32,16], index: 0, kind: input, shape index: {}]
  %s1 = inlined_call_operand.vmem [shape: f32[32,32], index: 1, kind: input, shape index: {}]
  %s2 = inlined_call_operand.vmem [shape: bf16[16,64], index: 2, kind: input, shape index: {}]
  %s3 = inlined_call_operand.vmem [shape: bf16[16,8], index: 3, kind: input, shape index: {}]
  %s4 = inlined_call_operand.vmem [shape: bf16[16,8], index: 4, kind: input, shape index: {}]
  %s5 = inlined_call_operand.vmem [shape: f32[1,64], index: 5, kind: input, shape index: {}]
  %s6 = inlined_call_operand.vmem [shape: f32[8,256], index: 6, kind: input, shape index: {}]
  %s7 = inlined_call_operand.vmem [shape: f32[32,256], index: 7, kind: input, shape index: {}]
  %s8 = inlined_call_operand.vmem [shape: bf16[256,32], index: 8, kind: input, shape index: {}]
  %s9 = inlined_call_operand.vmem [shape: f32[256,64], index: 9, kind: input, shape index: {}]
  %s10 = inlined_call_operand.vmem [shape: bf16[256,8], index: 10, kind: input, shape index: {}]
  %s11 = inlined_call_operand.vmem [shape: f32[8,64], index: 11, kind: input, shape index: {}]
  %s12 = inlined_call_operand.vmem [shape: f32[32,32], index: 12, kind: input, shape index: {}]
  %s13 = inlined_call_operand.vmem [shape: bf16[64,7], index: 13, kind: input, shape index: {}]
  %s14 = inlined_call_operand.vmem [shape: f32[1,64], index: 14, kind: input, shape index: {}]
  %s15 = inlined_call_operand.vmem [shape: f32[1,64], index: 15, kind: input, shape index: {}]
  %s16 = inlined_call_operand.vmem [shape: f32[1,7], index: 16, kind: input, shape index: {}]
  %s17 = inlined_call_operand.vmem [shape: f32[32,7], index: 17, kind: output, shape index: {}]
  %s18 = sld [smem:[#allocation0]]
  $region78: #{gat_forward.1} parent=0
    _
  %s20 = ssub.s32 1, %s18
  %s21 = scalar_select 0, %s20, %s18
  // Predicated region
  $region2: #{gat_forward.1} parent=0 // pred_check
    _
  $region3: #{gat_forward.1} parent=0 // pred_check_branch
    %23 = sbr.rel (0) target = $region5
  $region4: #{gat_forward.1} parent=0 // pred_region
    _
  $region5: #{gat_forward.1} parent=0 // pred_fallthru
    _
  // Predicated region
  $region6: #{gat_forward.1} parent=0 // pred_check
    _
  $region7: #{gat_forward.1} parent=0 // pred_check_branch
    %25 = sbr.rel (0) target = $region9
  $region8: #{gat_forward.1} parent=0 // pred_region
    _
  $region9: #{gat_forward.1} parent=0 // pred_fallthru
    _
  // Predicated region
  $region10: #{gat_forward.1} parent=0 // pred_check
    _
  $region11: #{gat_forward.1} parent=0 // pred_check_branch
    %27 = sbr.rel (0) target = $region13
  $region12: #{gat_forward.1} parent=0 // pred_region
    _
  $region13: #{gat_forward.1} parent=0 // pred_fallthru
    _
  // Predicated region
  $region14: #{gat_forward.1} parent=0 // pred_check
    _
  $region15: #{gat_forward.1} parent=0 // pred_check_branch
    %29 = sbr.rel (0) target = $region17
  $region16: #{gat_forward.1} parent=0 // pred_region
    _
  $region17: #{gat_forward.1} parent=0 // pred_fallthru
    _
  // Predicated region
  $region18: #{gat_forward.1} parent=0 // pred_check
    _
  $region19: #{gat_forward.1} parent=0 // pred_check_branch
    %31 = sbr.rel (0) target = $region21
  $region20: #{gat_forward.1} parent=0 // pred_region
    _
  $region21: #{gat_forward.1} parent=0 // pred_fallthru
    _
  // Predicated region
  $region22: #{gat_forward.1} parent=0 // pred_check
    _
  $region23: #{gat_forward.1} parent=0 // pred_check_branch
    %33 = sbr.rel (0) target = $region25
  $region24: #{gat_forward.1} parent=0 // pred_region
    _
  $region25: #{gat_forward.1} parent=0 // pred_fallthru
    _
  // Predicated region
  $region26: #{gat_forward.1} parent=0 // pred_check
    _
  $region27: #{gat_forward.1} parent=0 // pred_check_branch
    %35 = sbr.rel (0) target = $region29
  $region28: #{gat_forward.1} parent=0 // pred_region
    _
  $region29: #{gat_forward.1} parent=0 // pred_fallthru
    _
  // Predicated region
  $region30: #{gat_forward.1} parent=0 // pred_check
    _
  $region31: #{gat_forward.1} parent=0 // pred_check_branch
    %37 = sbr.rel (0) target = $region33
  $region32: #{gat_forward.1} parent=0 // pred_region
    _
  $region33: #{gat_forward.1} parent=0 // pred_fallthru
    _
  // Predicated region
  $region34: #{gat_forward.1} parent=0 // pred_check
    _
  $region35: #{gat_forward.1} parent=0 // pred_check_branch
    %39 = sbr.rel (0) target = $region37
  $region36: #{gat_forward.1} parent=0 // pred_region
    _
  $region37: #{gat_forward.1} parent=0 // pred_fallthru
    _
  // Predicated region
  $region38: #{gat_forward.1} parent=0 // pred_check
    _
  $region39: #{gat_forward.1} parent=0 // pred_check_branch
    %41 = sbr.rel (0) target = $region41
  $region40: #{gat_forward.1} parent=0 // pred_region
    _
  $region41: #{gat_forward.1} parent=0 // pred_fallthru
    _
  // Predicated region
  $region42: #{gat_forward.1} parent=0 // pred_check
    _
  $region43: #{gat_forward.1} parent=0 // pred_check_branch
    %43 = sbr.rel (0) target = $region45
  $region44: #{gat_forward.1} parent=0 // pred_region
    _
  $region45: #{gat_forward.1} parent=0 // pred_fallthru
    _
  // Predicated region
  $region46: #{gat_forward.1} parent=0 // pred_check
    _
  $region47: #{gat_forward.1} parent=0 // pred_check_branch
    %45 = sbr.rel (0) target = $region49
  $region48: #{gat_forward.1} parent=0 // pred_region
    _
  $region49: #{gat_forward.1} parent=0 // pred_fallthru
    _
  // Predicated region
  $region50: #{gat_forward.1} parent=0 // pred_check
    _
  $region51: #{gat_forward.1} parent=0 // pred_check_branch
    %47 = sbr.rel (0) target = $region53
  $region52: #{gat_forward.1} parent=0 // pred_region
    _
  $region53: #{gat_forward.1} parent=0 // pred_fallthru
    _
  // Predicated region
  $region54: #{gat_forward.1} parent=0 // pred_check
    _
  $region55: #{gat_forward.1} parent=0 // pred_check_branch
    %49 = sbr.rel (0) target = $region57
  $region56: #{gat_forward.1} parent=0 // pred_region
    _
  $region57: #{gat_forward.1} parent=0 // pred_fallthru
    _
  // Predicated region
  $region58: #{gat_forward.1} parent=0 // pred_check
    _
  $region59: #{gat_forward.1} parent=0 // pred_check_branch
    %51 = sbr.rel (0) target = $region61
  $region60: #{gat_forward.1} parent=0 // pred_region
    _
  $region61: #{gat_forward.1} parent=0 // pred_fallthru
    _
  // Predicated region
  $region62: #{gat_forward.1} parent=0 // pred_check
    _
  $region63: #{gat_forward.1} parent=0 // pred_check_branch
    %53 = sbr.rel (0) target = $region65
  $region64: #{gat_forward.1} parent=0 // pred_region
    _
  $region65: #{gat_forward.1} parent=0 // pred_fallthru
    _
  // Predicated region
  $region66: #{gat_forward.1} parent=0 // pred_check
    _
  $region67: #{gat_forward.1} parent=0 // pred_check_branch
    %55 = sbr.rel (0) target = $region69
  $region68: #{gat_forward.1} parent=0 // pred_region
    _
  $region69: #{gat_forward.1} parent=0 // pred_fallthru
    _
  %v57 = vld [vmem:[%s0] sm:$0xf]
  %v58 = vld [vmem:[%s0 + $0x4] sm:$0xf]
  %v59 = vld [vmem:[%s0 + $0x8] sm:$0xf]
  %v60 = vld [vmem:[%s0 + $0xc] sm:$0xf]
  %v61 = vld [vmem:[%s1] sm:$0xff]
  %v62 = vld [vmem:[%s1 + $0x8] sm:$0xff]
  %v63 = vld [vmem:[%s1 + $0x10] sm:$0xff]
  %v64 = vld [vmem:[%s1 + $0x18] sm:$0xff]
  %v65 = vld [vmem:[%s2] sm:$0xf]
  %v66 = vld [vmem:[%s2 + $0x4] sm:$0xf]
  %v71 = vunpack.c.l.b16 %v57
  %v72 = vunpack.c.l.b16 %v58
  %v73 = vunpack.c.l.b16 %v59
  %v74 = vunpack.c.l.b16 %v60
  %v75 = vpack.c.b16 %v72, %v71
  %v76 = vpack.c.b16 %v74, %v73
  %v79 = vunpack.c.l.b16 %v65
  %v80 = vunpack.c.l.b16 %v66
  %v81 = vpack.c.b16 %v80, %v79
  %vm83 = vcmask 130048
  %v85 = vsel %vm83, %v75, 0
  %v88 = vsel %vm83, %v76, 0
  %90 = vmatpush.bf16.msra.mxu0 0
  %91 = vmatpush.bf16.msra.mxu0 0
  %92 = vmatpush.bf16.msra.mxu0 0
  %93 = vmatpush.bf16.msra.mxu0 0
  %94 = vmatpush.bf16.msra.mxu0 0
  %95 = vmatpush.bf16.msra.mxu0 0
  %96 = vmatpush.bf16.msra.mxu0 0
  %97 = vmatpush.bf16.msra.mxu0 %v81
  %98 = vmatmul.bf16.gmra.mxu0 %v85
  %v99 = vpop.f32.mrf.mxu0
  %v100 = vadd.f32 0.0, %v99
  %v101 = vpop.f32.mrf.mxu0
  %v102 = vadd.f32 0.0, %v101
  %103 = vmatmul.bf16.gmra.mxu0 %v88
  %v104 = vpop.f32.mrf.mxu0
  %v105 = vadd.f32 0.0, %v104
  %v106 = vpop.f32.mrf.mxu0
  %v107 = vadd.f32 0.0, %v106
  %108 = vdwg.mxu0
  %v109 = vld [vmem:[%s3] sm:$0xf]
  %v110 = vld [vmem:[%s3 + $0x4] sm:$0xf]
  %v113 = vunpack.c.l.b16 %v109
  %v114 = vunpack.c.l.b16 %v110
  %v115 = vpack.c.b16 %v114, %v113
  %117 = vmatpush.bf16.msra.mxu0 0
  %118 = vmatpush.bf16.msra.mxu0 0
  %119 = vmatpush.bf16.msra.mxu0 0
  %120 = vmatpush.bf16.msra.mxu0 0
  %121 = vmatpush.bf16.msra.mxu0 0
  %122 = vmatpush.bf16.msra.mxu0 0
  %123 = vmatpush.bf16.msra.mxu0 0
  %124 = vmatpush.bf16.msra.mxu0 %v115
  %125 = vmatmul.bf16.gmra.mxu0 %v85
  %v126 = vpop.f32.mrf.mxu0
  %v127 = vadd.f32 0.0, %v126
  %v128 = vpop.f32.mrf.mxu0
  %v129 = vadd.f32 0.0, %v128
  %130 = vmatmul.bf16.gmra.mxu0 %v88
  %v131 = vpop.f32.mrf.mxu0
  %v132 = vadd.f32 0.0, %v131
  %v133 = vpop.f32.mrf.mxu0
  %v134 = vadd.f32 0.0, %v133
  %135 = vdwg.mxu0
  %v136 = vld [vmem:[%s4] sm:$0xf]
  %v137 = vld [vmem:[%s4 + $0x4] sm:$0xf]
  %v140 = vunpack.c.l.b16 %v136
  %v141 = vunpack.c.l.b16 %v137
  %v142 = vpack.c.b16 %v141, %v140
  %144 = vmatpush.bf16.msra.mxu0 0
  %145 = vmatpush.bf16.msra.mxu0 0
  %146 = vmatpush.bf16.msra.mxu0 0
  %147 = vmatpush.bf16.msra.mxu0 0
  %148 = vmatpush.bf16.msra.mxu0 0
  %149 = vmatpush.bf16.msra.mxu0 0
  %150 = vmatpush.bf16.msra.mxu0 0
  %151 = vmatpush.bf16.msra.mxu0 %v142
  %152 = vmatmul.bf16.gmra.mxu0 %v85
  %v153 = vpop.f32.mrf.mxu0
  %v154 = vadd.f32 0.0, %v153
  %v155 = vpop.f32.mrf.mxu0
  %v156 = vadd.f32 0.0, %v155
  %157 = vmatmul.bf16.gmra.mxu0 %v88
  %v158 = vpop.f32.mrf.mxu0
  %v159 = vadd.f32 0.0, %v158
  %v160 = vpop.f32.mrf.mxu0
  %v161 = vadd.f32 0.0, %v160
  %162 = vdwg.mxu0
  %v163 = vld [vmem:[%s6] sm:$0xff]
  %v164 = vld [vmem:[%s6 + $0x8] sm:$0xff]
  %v165 = vld [vmem:[%s7] sm:$0xff]
  %v166 = vld [vmem:[%s7 + $0x8] sm:$0xff]
  %v167 = vld [vmem:[%s7 + $0x10] sm:$0xff]
  %v168 = vld [vmem:[%s7 + $0x18] sm:$0xff]
  %v169 = vld [vmem:[%s7 + $0x20] sm:$0xff]
  %v170 = vld [vmem:[%s7 + $0x28] sm:$0xff]
  %v171 = vld [vmem:[%s7 + $0x30] sm:$0xff]
  %v172 = vld [vmem:[%s7 + $0x38] sm:$0xff]
  %vm173 = vcmask 64512
  %v175 = vsel %vm173, %v127, 0
  %v178 = vsel %vm173, %v129, 0
  %v181 = vsel %vm173, %v132, 0
  %v184 = vsel %vm173, %v134, 0
  %186 = vmatpush.msra.mxu0 0.0
  %187 = vmatpush.msra.mxu0 0.0
  %188 = vmatpush.msra.mxu0 0.0
  %189 = vmatpush.msra.mxu0 0.0
  %190 = vmatpush.msra.mxu0 0.0
  %191 = vmatpush.msra.mxu0 0.0
  %192 = vmatpush.msra.mxu0 0.0
  %193 = vmatpush.msra.mxu0 0.0
  %194 = vmatpush.msra.mxu0 0.0
  %195 = vmatpush.msra.mxu0 0.0
  %196 = vmatpush.msra.mxu0 0.0
  %197 = vmatpush.msra.mxu0 0.0
  %198 = vmatpush.msra.mxu0 0.0
  %199 = vmatpush.msra.mxu0 0.0
  %200 = vmatpush.msra.mxu0 0.0
  %201 = vmatpush.msra.mxu0 %v163
  %202 = vmatmul.f32.gmra.mxu0 %v175
  %v203 = vpop.f32.mrf.mxu0
  %v204 = vadd.f32 0.0, %v203
  %205 = vmatmul.f32.gmra.mxu0 %v178
  %v206 = vpop.f32.mrf.mxu0
  %v207 = vadd.f32 0.0, %v206
  %208 = vmatmul.f32.gmra.mxu0 %v181
  %v209 = vpop.f32.mrf.mxu0
  %v210 = vadd.f32 0.0, %v209
  %211 = vmatmul.f32.gmra.mxu0 %v184
  %v212 = vpop.f32.mrf.mxu0
  %v213 = vadd.f32 0.0, %v212
  %214 = vdwg.mxu0
  %215 = vmatpush.msra.mxu0 0.0
  %216 = vmatpush.msra.mxu0 0.0
  %217 = vmatpush.msra.mxu0 0.0
  %218 = vmatpush.msra.mxu0 0.0
  %219 = vmatpush.msra.mxu0 0.0
  %220 = vmatpush.msra.mxu0 0.0
  %221 = vmatpush.msra.mxu0 0.0
  %222 = vmatpush.msra.mxu0 0.0
  %223 = vmatpush.msra.mxu0 0.0
  %224 = vmatpush.msra.mxu0 0.0
  %225 = vmatpush.msra.mxu0 0.0
  %226 = vmatpush.msra.mxu0 0.0
  %227 = vmatpush.msra.mxu0 0.0
  %228 = vmatpush.msra.mxu0 0.0
  %229 = vmatpush.msra.mxu0 0.0
  %230 = vmatpush.msra.mxu0 %v164
  %231 = vmatmul.f32.gmra.mxu0 %v175
  %v232 = vpop.f32.mrf.mxu0
  %v233 = vadd.f32 0.0, %v232
  %234 = vmatmul.f32.gmra.mxu0 %v178
  %v235 = vpop.f32.mrf.mxu0
  %v236 = vadd.f32 0.0, %v235
  %237 = vmatmul.f32.gmra.mxu0 %v181
  %v238 = vpop.f32.mrf.mxu0
  %v239 = vadd.f32 0.0, %v238
  %240 = vmatmul.f32.gmra.mxu0 %v184
  %v241 = vpop.f32.mrf.mxu0
  %v242 = vadd.f32 0.0, %v241
  %243 = vdwg.mxu0
  %v244 = vmul.f32 %v204, %v165
  %v245 = vmul.f32 %v233, %v166
  %v246 = vmul.f32 %v207, %v167
  %v247 = vmul.f32 %v236, %v168
  %v248 = vmul.f32 %v210, %v169
  %v249 = vmul.f32 %v239, %v170
  %v250 = vmul.f32 %v213, %v171
  %v251 = vmul.f32 %v242, %v172
  %v252 = vadd.f32 %v244, %v246
  %v253 = vadd.f32 %v252, %v248
  %v254 = vadd.f32 %v253, %v250
  %v255 = vrot.slane %v254, 4
  %v256 = vadd.f32 %v254, %v255
  %v257 = vrot.slane %v256, 2
  %v258 = vadd.f32 %v256, %v257
  %v259 = vrot.slane %v258, 1
  %v260 = vadd.f32 %v258, %v259
  %v261 = vadd.f32 %v245, %v247
  %v262 = vadd.f32 %v261, %v249
  %v263 = vadd.f32 %v262, %v251
  %v264 = vrot.slane %v263, 4
  %v265 = vadd.f32 %v263, %v264
  %v266 = vrot.slane %v265, 2
  %v267 = vadd.f32 %v265, %v266
  %v268 = vrot.slane %v267, 1
  %v269 = vadd.f32 %v267, %v268
  %v270 = vsel %vm173, %v127, -inf
  %v271 = vsel %vm173, %v129, -inf
  %v272 = vsel %vm173, %v132, -inf
  %v273 = vsel %vm173, %v134, -inf
  %v274 = vmax.f32 %v270, %v271
  %v275 = vmax.f32 %v272, %v273
  %v276 = vmax.f32 %v274, %v275
  %v277 = vrot.slane %v276, 4
  %v278 = vmax.f32 %v276, %v277
  %v279 = vrot.slane %v278, 2
  %v280 = vmax.f32 %v278, %v279
  %v281 = vrot.slane %v280, 1
  %v282 = vmax.f32 %v280, %v281
  %v283 = vadd.f32 %v154, %v282
  %v284 = vadd.f32 %v156, %v282
  %v285 = vadd.f32 %v159, %v282
  %v286 = vadd.f32 %v161, %v282
  %v287 = vmul.f32 %v283, 0.2
  %v288 = vmul.f32 %v284, 0.2
  %v289 = vmul.f32 %v285, 0.2
  %v290 = vmul.f32 %v286, 0.2
  %v291 = vmax.f32 %v283, %v287
  %v292 = vmax.f32 %v284, %v288
  %v293 = vmax.f32 %v285, %v289
  %v294 = vmax.f32 %v286, %v290
  %v296 = vsel %vm173, %v291, 0
  %v299 = vsel %vm173, %v292, 0
  %v302 = vsel %vm173, %v293, 0
  %v305 = vsel %vm173, %v294, 0
  %307 = vmatpush.msra.mxu0 0.0
  %308 = vmatpush.msra.mxu0 0.0
  %309 = vmatpush.msra.mxu0 0.0
  %310 = vmatpush.msra.mxu0 0.0
  %311 = vmatpush.msra.mxu0 0.0
  %312 = vmatpush.msra.mxu0 0.0
  %313 = vmatpush.msra.mxu0 0.0
  %314 = vmatpush.msra.mxu0 0.0
  %315 = vmatpush.msra.mxu0 0.0
  %316 = vmatpush.msra.mxu0 0.0
  %317 = vmatpush.msra.mxu0 0.0
  %318 = vmatpush.msra.mxu0 0.0
  %319 = vmatpush.msra.mxu0 0.0
  %320 = vmatpush.msra.mxu0 0.0
  %321 = vmatpush.msra.mxu0 0.0
  %322 = vmatpush.msra.mxu0 %v163
  %323 = vmatmul.f32.gmra.mxu0 %v296
  %v324 = vpop.f32.mrf.mxu0
  %v325 = vadd.f32 0.0, %v324
  %326 = vmatmul.f32.gmra.mxu0 %v299
  %v327 = vpop.f32.mrf.mxu0
  %v328 = vadd.f32 0.0, %v327
  %329 = vmatmul.f32.gmra.mxu0 %v302
  %v330 = vpop.f32.mrf.mxu0
  %v331 = vadd.f32 0.0, %v330
  %332 = vmatmul.f32.gmra.mxu0 %v305
  %v333 = vpop.f32.mrf.mxu0
  %v334 = vadd.f32 0.0, %v333
  %335 = vdwg.mxu0
  %336 = vmatpush.msra.mxu0 0.0
  %337 = vmatpush.msra.mxu0 0.0
  %338 = vmatpush.msra.mxu0 0.0
  %339 = vmatpush.msra.mxu0 0.0
  %340 = vmatpush.msra.mxu0 0.0
  %341 = vmatpush.msra.mxu0 0.0
  %342 = vmatpush.msra.mxu0 0.0
  %343 = vmatpush.msra.mxu0 0.0
  %344 = vmatpush.msra.mxu0 0.0
  %345 = vmatpush.msra.mxu0 0.0
  %346 = vmatpush.msra.mxu0 0.0
  %347 = vmatpush.msra.mxu0 0.0
  %348 = vmatpush.msra.mxu0 0.0
  %349 = vmatpush.msra.mxu0 0.0
  %350 = vmatpush.msra.mxu0 0.0
  %351 = vmatpush.msra.mxu0 %v164
  %352 = vmatmul.f32.gmra.mxu0 %v296
  %v353 = vpop.f32.mrf.mxu0
  %v354 = vadd.f32 0.0, %v353
  %355 = vmatmul.f32.gmra.mxu0 %v299
  %v356 = vpop.f32.mrf.mxu0
  %v357 = vadd.f32 0.0, %v356
  %358 = vmatmul.f32.gmra.mxu0 %v302
  %v359 = vpop.f32.mrf.mxu0
  %v360 = vadd.f32 0.0, %v359
  %361 = vmatmul.f32.gmra.mxu0 %v305
  %v362 = vpop.f32.mrf.mxu0
  %v363 = vadd.f32 0.0, %v362
  %364 = vdwg.mxu0
  %vm365 = vcmask 261120
  %v367 = vsel %vm365, %v61, 0
  %v370 = vsel %vm365, %v62, 0
  %v373 = vsel %vm365, %v63, 0
  %v376 = vsel %vm365, %v64, 0
  %378 = vmatpush.msra.mxu0 0.0
  %379 = vmatpush.msra.mxu0 0.0
  %380 = vmatpush.msra.mxu0 0.0
  %381 = vmatpush.msra.mxu0 0.0
  %382 = vmatpush.msra.mxu0 0.0
  %383 = vmatpush.msra.mxu0 0.0
  %384 = vmatpush.msra.mxu0 0.0
  %385 = vmatpush.msra.mxu0 0.0
  %386 = vmatpush.msra.mxu0 0.0
  %387 = vmatpush.msra.mxu0 0.0
  %388 = vmatpush.msra.mxu0 0.0
  %389 = vmatpush.msra.mxu0 0.0
  %390 = vmatpush.msra.mxu0 %v171
  %391 = vmatpush.msra.mxu0 %v169
  %392 = vmatpush.msra.mxu0 %v167
  %393 = vmatpush.msra.mxu0 %v165
  %394 = vmatmul.f32.gmra.mxu0 %v367
  %v395 = vpop.f32.mrf.mxu0
  %v396 = vadd.f32 0.0, %v395
  %397 = vmatmul.f32.gmra.mxu0 %v370
  %v398 = vpop.f32.mrf.mxu0
  %v399 = vadd.f32 0.0, %v398
  %400 = vmatmul.f32.gmra.mxu0 %v373
  %v401 = vpop.f32.mrf.mxu0
  %v402 = vadd.f32 0.0, %v401
  %403 = vmatmul.f32.gmra.mxu0 %v376
  %v404 = vpop.f32.mrf.mxu0
  %v405 = vadd.f32 0.0, %v404
  %406 = vdwg.mxu0
  %407 = vmatpush.msra.mxu0 0.0
  %408 = vmatpush.msra.mxu0 0.0
  %409 = vmatpush.msra.mxu0 0.0
  %410 = vmatpush.msra.mxu0 0.0
  %411 = vmatpush.msra.mxu0 0.0
  %412 = vmatpush.msra.mxu0 0.0
  %413 = vmatpush.msra.mxu0 0.0
  %414 = vmatpush.msra.mxu0 0.0
  %415 = vmatpush.msra.mxu0 0.0
  %416 = vmatpush.msra.mxu0 0.0
  %417 = vmatpush.msra.mxu0 0.0
  %418 = vmatpush.msra.mxu0 0.0
  %419 = vmatpush.msra.mxu0 %v172
  %420 = vmatpush.msra.mxu0 %v170
  %421 = vmatpush.msra.mxu0 %v168
  %422 = vmatpush.msra.mxu0 %v166
  %423 = vmatmul.f32.gmra.mxu0 %v367
  %v424 = vpop.f32.mrf.mxu0
  %v425 = vadd.f32 0.0, %v424
  %426 = vmatmul.f32.gmra.mxu0 %v370
  %v427 = vpop.f32.mrf.mxu0
  %v428 = vadd.f32 0.0, %v427
  %429 = vmatmul.f32.gmra.mxu0 %v373
  %v430 = vpop.f32.mrf.mxu0
  %v431 = vadd.f32 0.0, %v430
  %432 = vmatmul.f32.gmra.mxu0 %v376
  %v433 = vpop.f32.mrf.mxu0
  %v434 = vadd.f32 0.0, %v433
  %435 = vdwg.mxu0
  %v437 = vsel %vm173, %v154, 0
  %v440 = vsel %vm173, %v156, 0
  %v443 = vsel %vm173, %v159, 0
  %v446 = vsel %vm173, %v161, 0
  %448 = vmatpush.msra.mxu0 0.0
  %449 = vmatpush.msra.mxu0 0.0
  %450 = vmatpush.msra.mxu0 0.0
  %451 = vmatpush.msra.mxu0 0.0
  %452 = vmatpush.msra.mxu0 0.0
  %453 = vmatpush.msra.mxu0 0.0
  %454 = vmatpush.msra.mxu0 0.0
  %455 = vmatpush.msra.mxu0 0.0
  %456 = vmatpush.msra.mxu0 0.0
  %457 = vmatpush.msra.mxu0 0.0
  %458 = vmatpush.msra.mxu0 0.0
  %459 = vmatpush.msra.mxu0 0.0
  %460 = vmatpush.msra.mxu0 0.0
  %461 = vmatpush.msra.mxu0 0.0
  %462 = vmatpush.msra.mxu0 0.0
  %463 = vmatpush.msra.mxu0 %v163
  %464 = vmatmul.f32.gmra.mxu0 %v437
  %v465 = vpop.f32.mrf.mxu0
  %v466 = vadd.f32 %v260, %v465
  %467 = vmatmul.f32.gmra.mxu0 %v440
  %v468 = vpop.f32.mrf.mxu0
  %v469 = vadd.f32 %v260, %v468
  %470 = vmatmul.f32.gmra.mxu0 %v443
  %v471 = vpop.f32.mrf.mxu0
  %v472 = vadd.f32 %v260, %v471
  %473 = vmatmul.f32.gmra.mxu0 %v446
  %v474 = vpop.f32.mrf.mxu0
  %v475 = vadd.f32 %v260, %v474
  %476 = vdwg.mxu0
  %477 = vmatpush.msra.mxu0 0.0
  %478 = vmatpush.msra.mxu0 0.0
  %479 = vmatpush.msra.mxu0 0.0
  %480 = vmatpush.msra.mxu0 0.0
  %481 = vmatpush.msra.mxu0 0.0
  %482 = vmatpush.msra.mxu0 0.0
  %483 = vmatpush.msra.mxu0 0.0
  %484 = vmatpush.msra.mxu0 0.0
  %485 = vmatpush.msra.mxu0 0.0
  %486 = vmatpush.msra.mxu0 0.0
  %487 = vmatpush.msra.mxu0 0.0
  %488 = vmatpush.msra.mxu0 0.0
  %489 = vmatpush.msra.mxu0 0.0
  %490 = vmatpush.msra.mxu0 0.0
  %491 = vmatpush.msra.mxu0 0.0
  %492 = vmatpush.msra.mxu0 %v164
  %493 = vmatmul.f32.gmra.mxu0 %v437
  %v494 = vpop.f32.mrf.mxu0
  %v495 = vadd.f32 %v269, %v494
  %496 = vmatmul.f32.gmra.mxu0 %v440
  %v497 = vpop.f32.mrf.mxu0
  %v498 = vadd.f32 %v269, %v497
  %499 = vmatmul.f32.gmra.mxu0 %v443
  %v500 = vpop.f32.mrf.mxu0
  %v501 = vadd.f32 %v269, %v500
  %502 = vmatmul.f32.gmra.mxu0 %v446
  %v503 = vpop.f32.mrf.mxu0
  %v504 = vadd.f32 %v269, %v503
  %505 = vdwg.mxu0
  %v506 = vmul.f32 %v466, 0.2
  %v507 = vmul.f32 %v495, 0.2
  %v508 = vmul.f32 %v469, 0.2
  %v509 = vmul.f32 %v498, 0.2
  %v510 = vmul.f32 %v472, 0.2
  %v511 = vmul.f32 %v501, 0.2
  %v512 = vmul.f32 %v475, 0.2
  %v513 = vmul.f32 %v504, 0.2
  %v514 = vmax.f32 %v466, %v506
  %v515 = vmax.f32 %v495, %v507
  %v516 = vmax.f32 %v469, %v508
  %v517 = vmax.f32 %v498, %v509
  %v518 = vmax.f32 %v472, %v510
  %v519 = vmax.f32 %v501, %v511
  %v520 = vmax.f32 %v475, %v512
  %v521 = vmax.f32 %v504, %v513
  %v522 = vsub.f32 %v514, %v325
  %v523 = vsub.f32 %v515, %v354
  %v524 = vsub.f32 %v516, %v328
  %v525 = vsub.f32 %v517, %v357
  %v526 = vsub.f32 %v518, %v331
  %v527 = vsub.f32 %v519, %v360
  %v528 = vsub.f32 %v520, %v334
  %v529 = vsub.f32 %v521, %v363
  %v530 = vmul.f32 %v522, 1.442695
  %v531 = vpow.pop %v530
  %v532 = vmul.f32 %v523, 1.442695
  %v533 = vpow.pop %v532
  %v534 = vmul.f32 %v524, 1.442695
  %v535 = vpow.pop %v534
  %v536 = vmul.f32 %v525, 1.442695
  %v537 = vpow.pop %v536
  %v538 = vmul.f32 %v526, 1.442695
  %v539 = vpow.pop %v538
  %v540 = vmul.f32 %v527, 1.442695
  %v541 = vpow.pop %v540
  %v542 = vmul.f32 %v528, 1.442695
  %v543 = vpow.pop %v542
  %v544 = vmul.f32 %v529, 1.442695
  %v545 = vpow.pop %v544
  %v546 = vmul.f32 %v531, %v396
  %v547 = vmul.f32 %v533, %v425
  %v548 = vmul.f32 %v535, %v399
  %v549 = vmul.f32 %v537, %v428
  %v550 = vmul.f32 %v539, %v402
  %v551 = vmul.f32 %v541, %v431
  %v552 = vmul.f32 %v543, %v405
  %v553 = vmul.f32 %v545, %v434
  %v554 = vpack.c.bf16 %v548, %v546
  %v555 = vpack.c.bf16 %v549, %v547
  %v556 = vpack.c.bf16 %v552, %v550
  %v557 = vpack.c.bf16 %v553, %v551
  %v558 = vpack.c.bf16 %v102, %v100
  %v559 = vpack.c.bf16 %v107, %v105
  %v560 = vld [vmem:[%s8] sm:$0xf]
  %v561 = vld [vmem:[%s8 + $0x4] sm:$0xf]
  %v562 = vld [vmem:[%s8 + $0x8] sm:$0xf]
  %v563 = vld [vmem:[%s8 + $0xc] sm:$0xf]
  %v564 = vld [vmem:[%s8 + $0x10] sm:$0xf]
  %v565 = vld [vmem:[%s8 + $0x14] sm:$0xf]
  %v566 = vld [vmem:[%s8 + $0x18] sm:$0xf]
  %v567 = vld [vmem:[%s8 + $0x1c] sm:$0xf]
  %v568 = vld [vmem:[%s8 + $0x20] sm:$0xf]
  %v569 = vld [vmem:[%s8 + $0x24] sm:$0xf]
  %v570 = vld [vmem:[%s8 + $0x28] sm:$0xf]
  %v571 = vld [vmem:[%s8 + $0x2c] sm:$0xf]
  %v572 = vld [vmem:[%s8 + $0x30] sm:$0xf]
  %v573 = vld [vmem:[%s8 + $0x34] sm:$0xf]
  %v574 = vld [vmem:[%s8 + $0x38] sm:$0xf]
  %v575 = vld [vmem:[%s8 + $0x3c] sm:$0xf]
  %v576 = vld [vmem:[%s8 + $0x40] sm:$0xf]
  %v577 = vld [vmem:[%s8 + $0x44] sm:$0xf]
  %v578 = vld [vmem:[%s8 + $0x48] sm:$0xf]
  %v579 = vld [vmem:[%s8 + $0x4c] sm:$0xf]
  %v580 = vld [vmem:[%s8 + $0x50] sm:$0xf]
  %v581 = vld [vmem:[%s8 + $0x54] sm:$0xf]
  %v582 = vld [vmem:[%s8 + $0x58] sm:$0xf]
  %v583 = vld [vmem:[%s8 + $0x5c] sm:$0xf]
  %v584 = vld [vmem:[%s8 + $0x60] sm:$0xf]
  %v585 = vld [vmem:[%s8 + $0x64] sm:$0xf]
  %v586 = vld [vmem:[%s8 + $0x68] sm:$0xf]
  %v587 = vld [vmem:[%s8 + $0x6c] sm:$0xf]
  %v588 = vld [vmem:[%s8 + $0x70] sm:$0xf]
  %v589 = vld [vmem:[%s8 + $0x74] sm:$0xf]
  %v590 = vld [vmem:[%s8 + $0x78] sm:$0xf]
  %v591 = vld [vmem:[%s8 + $0x7c] sm:$0xf]
  %v624 = vunpack.c.l.b16 %v560
  %v625 = vunpack.c.l.b16 %v561
  %v626 = vunpack.c.l.b16 %v562
  %v627 = vunpack.c.l.b16 %v563
  %v628 = vunpack.c.l.b16 %v564
  %v629 = vunpack.c.l.b16 %v565
  %v630 = vunpack.c.l.b16 %v566
  %v631 = vunpack.c.l.b16 %v567
  %v632 = vunpack.c.l.b16 %v568
  %v633 = vunpack.c.l.b16 %v569
  %v634 = vunpack.c.l.b16 %v570
  %v635 = vunpack.c.l.b16 %v571
  %v636 = vunpack.c.l.b16 %v572
  %v637 = vunpack.c.l.b16 %v573
  %v638 = vunpack.c.l.b16 %v574
  %v639 = vunpack.c.l.b16 %v575
  %v640 = vunpack.c.l.b16 %v576
  %v641 = vunpack.c.l.b16 %v577
  %v642 = vunpack.c.l.b16 %v578
  %v643 = vunpack.c.l.b16 %v579
  %v644 = vunpack.c.l.b16 %v580
  %v645 = vunpack.c.l.b16 %v581
  %v646 = vunpack.c.l.b16 %v582
  %v647 = vunpack.c.l.b16 %v583
  %v648 = vunpack.c.l.b16 %v584
  %v649 = vunpack.c.l.b16 %v585
  %v650 = vunpack.c.l.b16 %v586
  %v651 = vunpack.c.l.b16 %v587
  %v652 = vunpack.c.l.b16 %v588
  %v653 = vunpack.c.l.b16 %v589
  %v654 = vunpack.c.l.b16 %v590
  %v655 = vunpack.c.l.b16 %v591
  %v656 = vpack.c.b16 %v625, %v624
  %v657 = vpack.c.b16 %v627, %v626
  %v658 = vpack.c.b16 %v629, %v628
  %v659 = vpack.c.b16 %v631, %v630
  %v660 = vpack.c.b16 %v633, %v632
  %v661 = vpack.c.b16 %v635, %v634
  %v662 = vpack.c.b16 %v637, %v636
  %v663 = vpack.c.b16 %v639, %v638
  %v664 = vpack.c.b16 %v641, %v640
  %v665 = vpack.c.b16 %v643, %v642
  %v666 = vpack.c.b16 %v645, %v644
  %v667 = vpack.c.b16 %v647, %v646
  %v668 = vpack.c.b16 %v649, %v648
  %v669 = vpack.c.b16 %v651, %v650
  %v670 = vpack.c.b16 %v653, %v652
  %v671 = vpack.c.b16 %v655, %v654
  %v673 = vsel %vm365, %v656, 0
  %v676 = vsel %vm365, %v657, 0
  %v679 = vsel %vm365, %v658, 0
  %v682 = vsel %vm365, %v659, 0
  %v685 = vsel %vm365, %v660, 0
  %v688 = vsel %vm365, %v661, 0
  %v691 = vsel %vm365, %v662, 0
  %v694 = vsel %vm365, %v663, 0
  %v697 = vsel %vm365, %v664, 0
  %v700 = vsel %vm365, %v665, 0
  %v703 = vsel %vm365, %v666, 0
  %v706 = vsel %vm365, %v667, 0
  %v709 = vsel %vm365, %v668, 0
  %v712 = vsel %vm365, %v669, 0
  %v715 = vsel %vm365, %v670, 0
  %v718 = vsel %vm365, %v671, 0
  %720 = vmatpush.bf16.msra.mxu0 0
  %721 = vmatpush.bf16.msra.mxu0 0
  %722 = vmatpush.bf16.msra.mxu0 0
  %723 = vmatpush.bf16.msra.mxu0 0
  %724 = vmatpush.bf16.msra.mxu0 0
  %725 = vmatpush.bf16.msra.mxu0 0
  %726 = vmatpush.bf16.msra.mxu0 %v559
  %727 = vmatpush.bf16.msra.mxu0 %v558
  %728 = vmatmul.bf16.gmra.mxu0 %v673
  %v729 = vpop.f32.mrf.mxu0
  %v730 = vadd.f32 0.0, %v729
  %v731 = vpop.f32.mrf.mxu0
  %v732 = vadd.f32 0.0, %v731
  %733 = vmatmul.bf16.gmra.mxu0 %v676
  %v734 = vpop.f32.mrf.mxu0
  %v735 = vadd.f32 0.0, %v734
  %v736 = vpop.f32.mrf.mxu0
  %v737 = vadd.f32 0.0, %v736
  %738 = vmatmul.bf16.gmra.mxu0 %v679
  %v739 = vpop.f32.mrf.mxu0
  %v740 = vadd.f32 0.0, %v739
  %v741 = vpop.f32.mrf.mxu0
  %v742 = vadd.f32 0.0, %v741
  %743 = vmatmul.bf16.gmra.mxu0 %v682
  %v744 = vpop.f32.mrf.mxu0
  %v745 = vadd.f32 0.0, %v744
  %v746 = vpop.f32.mrf.mxu0
  %v747 = vadd.f32 0.0, %v746
  %748 = vmatmul.bf16.gmra.mxu0 %v685
  %v749 = vpop.f32.mrf.mxu0
  %v750 = vadd.f32 0.0, %v749
  %v751 = vpop.f32.mrf.mxu0
  %v752 = vadd.f32 0.0, %v751
  %753 = vmatmul.bf16.gmra.mxu0 %v688
  %v754 = vpop.f32.mrf.mxu0
  %v755 = vadd.f32 0.0, %v754
  %v756 = vpop.f32.mrf.mxu0
  %v757 = vadd.f32 0.0, %v756
  %758 = vmatmul.bf16.gmra.mxu0 %v691
  %v759 = vpop.f32.mrf.mxu0
  %v760 = vadd.f32 0.0, %v759
  %v761 = vpop.f32.mrf.mxu0
  %v762 = vadd.f32 0.0, %v761
  %763 = vmatmul.bf16.gmra.mxu0 %v694
  %v764 = vpop.f32.mrf.mxu0
  %v765 = vadd.f32 0.0, %v764
  %v766 = vpop.f32.mrf.mxu0
  %v767 = vadd.f32 0.0, %v766
  %768 = vmatmul.bf16.gmra.mxu0 %v697
  %v769 = vpop.f32.mrf.mxu0
  %v770 = vadd.f32 0.0, %v769
  %v771 = vpop.f32.mrf.mxu0
  %v772 = vadd.f32 0.0, %v771
  %773 = vmatmul.bf16.gmra.mxu0 %v700
  %v774 = vpop.f32.mrf.mxu0
  %v775 = vadd.f32 0.0, %v774
  %v776 = vpop.f32.mrf.mxu0
  %v777 = vadd.f32 0.0, %v776
  %778 = vmatmul.bf16.gmra.mxu0 %v703
  %v779 = vpop.f32.mrf.mxu0
  %v780 = vadd.f32 0.0, %v779
  %v781 = vpop.f32.mrf.mxu0
  %v782 = vadd.f32 0.0, %v781
  %783 = vmatmul.bf16.gmra.mxu0 %v706
  %v784 = vpop.f32.mrf.mxu0
  %v785 = vadd.f32 0.0, %v784
  %v786 = vpop.f32.mrf.mxu0
  %v787 = vadd.f32 0.0, %v786
  %788 = vmatmul.bf16.gmra.mxu0 %v709
  %v789 = vpop.f32.mrf.mxu0
  %v790 = vadd.f32 0.0, %v789
  %v791 = vpop.f32.mrf.mxu0
  %v792 = vadd.f32 0.0, %v791
  %793 = vmatmul.bf16.gmra.mxu0 %v712
  %v794 = vpop.f32.mrf.mxu0
  %v795 = vadd.f32 0.0, %v794
  %v796 = vpop.f32.mrf.mxu0
  %v797 = vadd.f32 0.0, %v796
  %798 = vmatmul.bf16.gmra.mxu0 %v715
  %v799 = vpop.f32.mrf.mxu0
  %v800 = vadd.f32 0.0, %v799
  %v801 = vpop.f32.mrf.mxu0
  %v802 = vadd.f32 0.0, %v801
  %803 = vmatmul.bf16.gmra.mxu0 %v718
  %v804 = vpop.f32.mrf.mxu0
  %v805 = vadd.f32 0.0, %v804
  %v806 = vpop.f32.mrf.mxu0
  %v807 = vadd.f32 0.0, %v806
  %808 = vdwg.mxu0
  %v809 = vld [vmem:[%s9] sm:$0xff]
  %v810 = vld [vmem:[%s9 + $0x8] sm:$0xff]
  %v811 = vld [vmem:[%s9 + $0x10] sm:$0xff]
  %v812 = vld [vmem:[%s9 + $0x18] sm:$0xff]
  %v813 = vld [vmem:[%s9 + $0x20] sm:$0xff]
  %v814 = vld [vmem:[%s9 + $0x28] sm:$0xff]
  %v815 = vld [vmem:[%s9 + $0x30] sm:$0xff]
  %v816 = vld [vmem:[%s9 + $0x38] sm:$0xff]
  %v817 = vld [vmem:[%s9 + $0x40] sm:$0xff]
  %v818 = vld [vmem:[%s9 + $0x48] sm:$0xff]
  %v819 = vld [vmem:[%s9 + $0x50] sm:$0xff]
  %v820 = vld [vmem:[%s9 + $0x58] sm:$0xff]
  %v821 = vld [vmem:[%s9 + $0x60] sm:$0xff]
  %v822 = vld [vmem:[%s9 + $0x68] sm:$0xff]
  %v823 = vld [vmem:[%s9 + $0x70] sm:$0xff]
  %v824 = vld [vmem:[%s9 + $0x78] sm:$0xff]
  %v825 = vld [vmem:[%s9 + $0x80] sm:$0xff]
  %v826 = vld [vmem:[%s9 + $0x88] sm:$0xff]
  %v827 = vld [vmem:[%s9 + $0x90] sm:$0xff]
  %v828 = vld [vmem:[%s9 + $0x98] sm:$0xff]
  %v829 = vld [vmem:[%s9 + $0xa0] sm:$0xff]
  %v830 = vld [vmem:[%s9 + $0xa8] sm:$0xff]
  %v831 = vld [vmem:[%s9 + $0xb0] sm:$0xff]
  %v832 = vld [vmem:[%s9 + $0xb8] sm:$0xff]
  %v833 = vld [vmem:[%s9 + $0xc0] sm:$0xff]
  %v834 = vld [vmem:[%s9 + $0xc8] sm:$0xff]
  %v835 = vld [vmem:[%s9 + $0xd0] sm:$0xff]
  %v836 = vld [vmem:[%s9 + $0xd8] sm:$0xff]
  %v837 = vld [vmem:[%s9 + $0xe0] sm:$0xff]
  %v838 = vld [vmem:[%s9 + $0xe8] sm:$0xff]
  %v839 = vld [vmem:[%s9 + $0xf0] sm:$0xff]
  %v840 = vld [vmem:[%s9 + $0xf8] sm:$0xff]
  %v841 = vmul.f32 %v730, %v809
  %v842 = vmul.f32 %v732, %v810
  %v843 = vmul.f32 %v735, %v811
  %v844 = vmul.f32 %v737, %v812
  %v845 = vmul.f32 %v740, %v813
  %v846 = vmul.f32 %v742, %v814
  %v847 = vmul.f32 %v745, %v815
  %v848 = vmul.f32 %v747, %v816
  %v849 = vmul.f32 %v750, %v817
  %v850 = vmul.f32 %v752, %v818
  %v851 = vmul.f32 %v755, %v819
  %v852 = vmul.f32 %v757, %v820
  %v853 = vmul.f32 %v760, %v821
  %v854 = vmul.f32 %v762, %v822
  %v855 = vmul.f32 %v765, %v823
  %v856 = vmul.f32 %v767, %v824
  %v857 = vmul.f32 %v770, %v825
  %v858 = vmul.f32 %v772, %v826
  %v859 = vmul.f32 %v775, %v827
  %v860 = vmul.f32 %v777, %v828
  %v861 = vmul.f32 %v780, %v829
  %v862 = vmul.f32 %v782, %v830
  %v863 = vmul.f32 %v785, %v831
  %v864 = vmul.f32 %v787, %v832
  %v865 = vmul.f32 %v790, %v833
  %v866 = vmul.f32 %v792, %v834
  %v867 = vmul.f32 %v795, %v835
  %v868 = vmul.f32 %v797, %v836
  %v869 = vmul.f32 %v800, %v837
  %v870 = vmul.f32 %v802, %v838
  %v871 = vmul.f32 %v805, %v839
  %v872 = vmul.f32 %v807, %v840
  %v873 = vpack.c.bf16 %v842, %v841
  %v874 = vpack.c.bf16 %v844, %v843
  %v875 = vpack.c.bf16 %v846, %v845
  %v876 = vpack.c.bf16 %v848, %v847
  %v877 = vpack.c.bf16 %v850, %v849
  %v878 = vpack.c.bf16 %v852, %v851
  %v879 = vpack.c.bf16 %v854, %v853
  %v880 = vpack.c.bf16 %v856, %v855
  %v881 = vpack.c.bf16 %v858, %v857
  %v882 = vpack.c.bf16 %v860, %v859
  %v883 = vpack.c.bf16 %v862, %v861
  %v884 = vpack.c.bf16 %v864, %v863
  %v885 = vpack.c.bf16 %v866, %v865
  %v886 = vpack.c.bf16 %v868, %v867
  %v887 = vpack.c.bf16 %v870, %v869
  %v888 = vpack.c.bf16 %v872, %v871
  %889 = vmatpush.bf16.msra.mxu0 %v880
  %890 = vmatpush.bf16.msra.mxu0 %v879
  %891 = vmatpush.bf16.msra.mxu0 %v878
  %892 = vmatpush.bf16.msra.mxu0 %v877
  %893 = vmatpush.bf16.msra.mxu0 %v876
  %894 = vmatpush.bf16.msra.mxu0 %v875
  %895 = vmatpush.bf16.msra.mxu0 %v874
  %896 = vmatpush.bf16.msra.mxu0 %v873
  %897 = vmatmul.bf16.gmra.mxu0 %v554
  %v898 = vpop.f32.mrf.mxu0
  %v899 = vadd.f32 0.0, %v898
  %v900 = vpop.f32.mrf.mxu0
  %v901 = vadd.f32 0.0, %v900
  %902 = vmatmul.bf16.gmra.mxu0 %v556
  %v903 = vpop.f32.mrf.mxu0
  %v904 = vadd.f32 0.0, %v903
  %v905 = vpop.f32.mrf.mxu0
  %v906 = vadd.f32 0.0, %v905
  %907 = vdwg.mxu0
  %908 = vmatpush.bf16.msra.mxu0 %v888
  %909 = vmatpush.bf16.msra.mxu0 %v887
  %910 = vmatpush.bf16.msra.mxu0 %v886
  %911 = vmatpush.bf16.msra.mxu0 %v885
  %912 = vmatpush.bf16.msra.mxu0 %v884
  %913 = vmatpush.bf16.msra.mxu0 %v883
  %914 = vmatpush.bf16.msra.mxu0 %v882
  %915 = vmatpush.bf16.msra.mxu0 %v881
  %916 = vmatmul.bf16.gmra.mxu0 %v555
  %v917 = vpop.f32.mrf.mxu0
  %v918 = vadd.f32 %v899, %v917
  %v919 = vpop.f32.mrf.mxu0
  %v920 = vadd.f32 %v901, %v919
  %921 = vmatmul.bf16.gmra.mxu0 %v557
  %v922 = vpop.f32.mrf.mxu0
  %v923 = vadd.f32 %v904, %v922
  %v924 = vpop.f32.mrf.mxu0
  %v925 = vadd.f32 %v906, %v924
  %926 = vdwg.mxu0
  %v927 = vld [vmem:[%s10] sm:$0xf]
  %v928 = vld [vmem:[%s10 + $0x4] sm:$0xf]
  %v929 = vld [vmem:[%s10 + $0x8] sm:$0xf]
  %v930 = vld [vmem:[%s10 + $0xc] sm:$0xf]
  %v931 = vld [vmem:[%s10 + $0x10] sm:$0xf]
  %v932 = vld [vmem:[%s10 + $0x14] sm:$0xf]
  %v933 = vld [vmem:[%s10 + $0x18] sm:$0xf]
  %v934 = vld [vmem:[%s10 + $0x1c] sm:$0xf]
  %v935 = vld [vmem:[%s10 + $0x20] sm:$0xf]
  %v936 = vld [vmem:[%s10 + $0x24] sm:$0xf]
  %v937 = vld [vmem:[%s10 + $0x28] sm:$0xf]
  %v938 = vld [vmem:[%s10 + $0x2c] sm:$0xf]
  %v939 = vld [vmem:[%s10 + $0x30] sm:$0xf]
  %v940 = vld [vmem:[%s10 + $0x34] sm:$0xf]
  %v941 = vld [vmem:[%s10 + $0x38] sm:$0xf]
  %v942 = vld [vmem:[%s10 + $0x3c] sm:$0xf]
  %v943 = vld [vmem:[%s10 + $0x40] sm:$0xf]
  %v944 = vld [vmem:[%s10 + $0x44] sm:$0xf]
  %v945 = vld [vmem:[%s10 + $0x48] sm:$0xf]
  %v946 = vld [vmem:[%s10 + $0x4c] sm:$0xf]
  %v947 = vld [vmem:[%s10 + $0x50] sm:$0xf]
  %v948 = vld [vmem:[%s10 + $0x54] sm:$0xf]
  %v949 = vld [vmem:[%s10 + $0x58] sm:$0xf]
  %v950 = vld [vmem:[%s10 + $0x5c] sm:$0xf]
  %v951 = vld [vmem:[%s10 + $0x60] sm:$0xf]
  %v952 = vld [vmem:[%s10 + $0x64] sm:$0xf]
  %v953 = vld [vmem:[%s10 + $0x68] sm:$0xf]
  %v954 = vld [vmem:[%s10 + $0x6c] sm:$0xf]
  %v955 = vld [vmem:[%s10 + $0x70] sm:$0xf]
  %v956 = vld [vmem:[%s10 + $0x74] sm:$0xf]
  %v957 = vld [vmem:[%s10 + $0x78] sm:$0xf]
  %v958 = vld [vmem:[%s10 + $0x7c] sm:$0xf]
  %v991 = vunpack.c.l.b16 %v927
  %v992 = vunpack.c.l.b16 %v928
  %v993 = vunpack.c.l.b16 %v929
  %v994 = vunpack.c.l.b16 %v930
  %v995 = vunpack.c.l.b16 %v931
  %v996 = vunpack.c.l.b16 %v932
  %v997 = vunpack.c.l.b16 %v933
  %v998 = vunpack.c.l.b16 %v934
  %v999 = vunpack.c.l.b16 %v935
  %v1000 = vunpack.c.l.b16 %v936
  %v1001 = vunpack.c.l.b16 %v937
  %v1002 = vunpack.c.l.b16 %v938
  %v1003 = vunpack.c.l.b16 %v939
  %v1004 = vunpack.c.l.b16 %v940
  %v1005 = vunpack.c.l.b16 %v941
  %v1006 = vunpack.c.l.b16 %v942
  %v1007 = vunpack.c.l.b16 %v943
  %v1008 = vunpack.c.l.b16 %v944
  %v1009 = vunpack.c.l.b16 %v945
  %v1010 = vunpack.c.l.b16 %v946
  %v1011 = vunpack.c.l.b16 %v947
  %v1012 = vunpack.c.l.b16 %v948
  %v1013 = vunpack.c.l.b16 %v949
  %v1014 = vunpack.c.l.b16 %v950
  %v1015 = vunpack.c.l.b16 %v951
  %v1016 = vunpack.c.l.b16 %v952
  %v1017 = vunpack.c.l.b16 %v953
  %v1018 = vunpack.c.l.b16 %v954
  %v1019 = vunpack.c.l.b16 %v955
  %v1020 = vunpack.c.l.b16 %v956
  %v1021 = vunpack.c.l.b16 %v957
  %v1022 = vunpack.c.l.b16 %v958
  %v1023 = vpack.c.b16 %v992, %v991
  %v1024 = vpack.c.b16 %v994, %v993
  %v1025 = vpack.c.b16 %v996, %v995
  %v1026 = vpack.c.b16 %v998, %v997
  %v1027 = vpack.c.b16 %v1000, %v999
  %v1028 = vpack.c.b16 %v1002, %v1001
  %v1029 = vpack.c.b16 %v1004, %v1003
  %v1030 = vpack.c.b16 %v1006, %v1005
  %v1031 = vpack.c.b16 %v1008, %v1007
  %v1032 = vpack.c.b16 %v1010, %v1009
  %v1033 = vpack.c.b16 %v1012, %v1011
  %v1034 = vpack.c.b16 %v1014, %v1013
  %v1035 = vpack.c.b16 %v1016, %v1015
  %v1036 = vpack.c.b16 %v1018, %v1017
  %v1037 = vpack.c.b16 %v1020, %v1019
  %v1038 = vpack.c.b16 %v1022, %v1021
  %1055 = vmatpush.bf16.msra.mxu0 %v1030
  %1056 = vmatpush.bf16.msra.mxu0 %v1029
  %1057 = vmatpush.bf16.msra.mxu0 %v1028
  %1058 = vmatpush.bf16.msra.mxu0 %v1027
  %1059 = vmatpush.bf16.msra.mxu0 %v1026
  %1060 = vmatpush.bf16.msra.mxu0 %v1025
  %1061 = vmatpush.bf16.msra.mxu0 %v1024
  %1062 = vmatpush.bf16.msra.mxu0 %v1023
  %1063 = vmatmul.bf16.gmra.mxu0 %v554
  %v1064 = vpop.f32.mrf.mxu0
  %v1065 = vadd.f32 0.0, %v1064
  %v1066 = vpop.f32.mrf.mxu0
  %v1067 = vadd.f32 0.0, %v1066
  %1068 = vmatmul.bf16.gmra.mxu0 %v556
  %v1069 = vpop.f32.mrf.mxu0
  %v1070 = vadd.f32 0.0, %v1069
  %v1071 = vpop.f32.mrf.mxu0
  %v1072 = vadd.f32 0.0, %v1071
  %1073 = vdwg.mxu0
  %1074 = vmatpush.bf16.msra.mxu0 %v1038
  %1075 = vmatpush.bf16.msra.mxu0 %v1037
  %1076 = vmatpush.bf16.msra.mxu0 %v1036
  %1077 = vmatpush.bf16.msra.mxu0 %v1035
  %1078 = vmatpush.bf16.msra.mxu0 %v1034
  %1079 = vmatpush.bf16.msra.mxu0 %v1033
  %1080 = vmatpush.bf16.msra.mxu0 %v1032
  %1081 = vmatpush.bf16.msra.mxu0 %v1031
  %1082 = vmatmul.bf16.gmra.mxu0 %v555
  %v1083 = vpop.f32.mrf.mxu0
  %v1084 = vadd.f32 %v1065, %v1083
  %v1085 = vpop.f32.mrf.mxu0
  %v1086 = vadd.f32 %v1067, %v1085
  %1087 = vmatmul.bf16.gmra.mxu0 %v557
  %v1088 = vpop.f32.mrf.mxu0
  %v1089 = vadd.f32 %v1070, %v1088
  %v1090 = vpop.f32.mrf.mxu0
  %v1091 = vadd.f32 %v1072, %v1090
  %1092 = vdwg.mxu0
  %v1093 = vrcp.pop %v1084
  %v1094 = vrcp.pop %v1086
  %v1095 = vrcp.pop %v1089
  %v1096 = vrcp.pop %v1091
  %v1097 = vld [vmem:[%s11] sm:$0xff]
  %v1099 = vsel %vm173, %v1093, 0
  %v1102 = vsel %vm173, %v1094, 0
  %v1105 = vsel %vm173, %v1095, 0
  %v1108 = vsel %vm173, %v1096, 0
  %1110 = vmatpush.msra.mxu0 0.0
  %1111 = vmatpush.msra.mxu0 0.0
  %1112 = vmatpush.msra.mxu0 0.0
  %1113 = vmatpush.msra.mxu0 0.0
  %1114 = vmatpush.msra.mxu0 0.0
  %1115 = vmatpush.msra.mxu0 0.0
  %1116 = vmatpush.msra.mxu0 0.0
  %1117 = vmatpush.msra.mxu0 0.0
  %1118 = vmatpush.msra.mxu0 0.0
  %1119 = vmatpush.msra.mxu0 0.0
  %1120 = vmatpush.msra.mxu0 0.0
  %1121 = vmatpush.msra.mxu0 0.0
  %1122 = vmatpush.msra.mxu0 0.0
  %1123 = vmatpush.msra.mxu0 0.0
  %1124 = vmatpush.msra.mxu0 0.0
  %1125 = vmatpush.msra.mxu0 %v1097
  %1126 = vmatmul.f32.gmra.mxu0 %v1099
  %v1127 = vpop.f32.mrf.mxu0
  %v1128 = vadd.f32 0.0, %v1127
  %1129 = vmatmul.f32.gmra.mxu0 %v1102
  %v1130 = vpop.f32.mrf.mxu0
  %v1131 = vadd.f32 0.0, %v1130
  %1132 = vmatmul.f32.gmra.mxu0 %v1105
  %v1133 = vpop.f32.mrf.mxu0
  %v1134 = vadd.f32 0.0, %v1133
  %1135 = vmatmul.f32.gmra.mxu0 %v1108
  %v1136 = vpop.f32.mrf.mxu0
  %v1137 = vadd.f32 0.0, %v1136
  %1138 = vdwg.mxu0
  %v1139 = vmul.f32 %v918, %v1128
  %v1140 = vmul.f32 %v920, %v1131
  %v1141 = vmul.f32 %v923, %v1134
  %v1142 = vmul.f32 %v925, %v1137
  %v1143 = vld [vmem:[%s5] sm:$0x1]
  %v1145 = vperm.slane %v1143, 0
  %v1147 = vadd.f32 %v1139, %v1145
  %v1148 = vadd.f32 %v1140, %v1145
  %v1149 = vadd.f32 %v1141, %v1145
  %v1150 = vadd.f32 %v1142, %v1145
  %vm1151 = vcmp.gt.f32.partialorder %v1147, 0.0
  %vm1152 = vcmp.gt.f32.partialorder %v1148, 0.0
  %vm1153 = vcmp.gt.f32.partialorder %v1149, 0.0
  %vm1154 = vcmp.gt.f32.partialorder %v1150, 0.0
  %v1155 = vmin.f32 %v1147, 0.0
  %v1156 = vmin.f32 %v1148, 0.0
  %v1157 = vmin.f32 %v1149, 0.0
  %v1158 = vmin.f32 %v1150, 0.0
  %v1159 = vmul.f32 %v1155, 1.442695
  %v1160 = vpow.pop %v1159
  %v1161 = vmul.f32 %v1156, 1.442695
  %v1162 = vpow.pop %v1161
  %v1163 = vmul.f32 %v1157, 1.442695
  %v1164 = vpow.pop %v1163
  %v1165 = vmul.f32 %v1158, 1.442695
  %v1166 = vpow.pop %v1165
  %v1167 = vsub.f32 %v1160, 1.0
  %v1168 = vsub.f32 %v1162, 1.0
  %v1169 = vsub.f32 %v1164, 1.0
  %v1170 = vsub.f32 %v1166, 1.0
  %v1171 = vsel %vm1151, %v1147, %v1167
  %v1172 = vsel %vm1152, %v1148, %v1168
  %v1173 = vsel %vm1153, %v1149, %v1169
  %v1174 = vsel %vm1154, %v1150, %v1170
  %v1175 = vpack.c.bf16 %v1172, %v1171
  %v1176 = vpack.c.bf16 %v1174, %v1173
  %v1177 = vld [vmem:[%s13] sm:$0xf]
  %v1178 = vld [vmem:[%s13 + $0x4] sm:$0xf]
  %v1179 = vld [vmem:[%s13 + $0x8] sm:$0xf]
  %v1180 = vld [vmem:[%s13 + $0xc] sm:$0xf]
  %v1181 = vld [vmem:[%s13 + $0x10] sm:$0xf]
  %v1182 = vld [vmem:[%s13 + $0x14] sm:$0xf]
  %v1183 = vld [vmem:[%s13 + $0x18] sm:$0xf]
  %v1184 = vld [vmem:[%s13 + $0x1c] sm:$0xf]
  %v1193 = vunpack.c.l.b16 %v1177
  %v1194 = vunpack.c.l.b16 %v1178
  %v1195 = vunpack.c.l.b16 %v1179
  %v1196 = vunpack.c.l.b16 %v1180
  %v1197 = vunpack.c.l.b16 %v1181
  %v1198 = vunpack.c.l.b16 %v1182
  %v1199 = vunpack.c.l.b16 %v1183
  %v1200 = vunpack.c.l.b16 %v1184
  %v1201 = vpack.c.b16 %v1194, %v1193
  %v1202 = vpack.c.b16 %v1196, %v1195
  %v1203 = vpack.c.b16 %v1198, %v1197
  %v1204 = vpack.c.b16 %v1200, %v1199
  %vm1209 = vcmask 523264
  %v1211 = vsel %vm1209, %v1175, 0
  %v1214 = vsel %vm1209, %v1176, 0
  %1216 = vmatpush.bf16.msra.mxu0 0
  %1217 = vmatpush.bf16.msra.mxu0 0
  %1218 = vmatpush.bf16.msra.mxu0 0
  %1219 = vmatpush.bf16.msra.mxu0 0
  %1220 = vmatpush.bf16.msra.mxu0 %v1204
  %1221 = vmatpush.bf16.msra.mxu0 %v1203
  %1222 = vmatpush.bf16.msra.mxu0 %v1202
  %1223 = vmatpush.bf16.msra.mxu0 %v1201
  %1224 = vmatmul.bf16.gmra.mxu0 %v1211
  %v1225 = vpop.f32.mrf.mxu0
  %v1226 = vadd.f32 0.0, %v1225
  %v1227 = vpop.f32.mrf.mxu0
  %v1228 = vadd.f32 0.0, %v1227
  %1229 = vmatmul.bf16.gmra.mxu0 %v1214
  %v1230 = vpop.f32.mrf.mxu0
  %v1231 = vadd.f32 0.0, %v1230
  %v1232 = vpop.f32.mrf.mxu0
  %v1233 = vadd.f32 0.0, %v1232
  %1234 = vdwg.mxu0
  %v1235 = vld [vmem:[%s14] sm:$0x1]
  %v1237 = vperm.slane %v1235, 0
  %v1239 = vmul.f32 %v1171, %v1237
  %v1240 = vmul.f32 %v1172, %v1237
  %v1241 = vmul.f32 %v1173, %v1237
  %v1242 = vmul.f32 %v1174, %v1237
  %v1243 = vsel %vm1209, %v1239, 0.0
  %1244 = vadd.xlane.f32.xlu0 %v1243
  %v1245 = vpop.xlane.xlu0 %1244
  %v1246 = vsel %vm1209, %v1240, 0.0
  %1247 = vadd.xlane.f32.xlu0 %v1246
  %v1248 = vpop.xlane.xlu0 %1247
  %v1249 = vsel %vm1209, %v1241, 0.0
  %1250 = vadd.xlane.f32.xlu0 %v1249
  %v1251 = vpop.xlane.xlu0 %1250
  %v1252 = vsel %vm1209, %v1242, 0.0
  %1253 = vadd.xlane.f32.xlu0 %v1252
  %v1254 = vpop.xlane.xlu0 %1253
  %v1255 = vld [vmem:[%s15] sm:$0x1]
  %v1257 = vperm.slane %v1255, 0
  %v1259 = vmul.f32 %v1171, %v1257
  %v1260 = vmul.f32 %v1172, %v1257
  %v1261 = vmul.f32 %v1173, %v1257
  %v1262 = vmul.f32 %v1174, %v1257
  %v1263 = vsel %vm1209, %v1259, 0.0
  %1264 = vadd.xlane.f32.xlu0 %v1263
  %v1265 = vpop.xlane.xlu0 %1264
  %v1266 = vsel %vm1209, %v1260, 0.0
  %1267 = vadd.xlane.f32.xlu0 %v1266
  %v1268 = vpop.xlane.xlu0 %1267
  %v1269 = vsel %vm1209, %v1261, 0.0
  %1270 = vadd.xlane.f32.xlu0 %v1269
  %v1271 = vpop.xlane.xlu0 %1270
  %v1272 = vsel %vm1209, %v1262, 0.0
  %1273 = vadd.xlane.f32.xlu0 %v1272
  %v1274 = vpop.xlane.xlu0 %1273
  %v1275 = vld [vmem:[%s12] sm:$0xff]
  %v1276 = vld [vmem:[%s12 + $0x8] sm:$0xff]
  %v1277 = vld [vmem:[%s12 + $0x10] sm:$0xff]
  %v1278 = vld [vmem:[%s12 + $0x18] sm:$0xff]
  %v1279 = vmul.f32 %v1245, %v1275
  %v1280 = vmul.f32 %v1248, %v1276
  %v1281 = vmul.f32 %v1251, %v1277
  %v1282 = vmul.f32 %v1254, %v1278
  %v1283 = vsel %vm365, %v1279, 0.0
  %v1284 = vsel %vm365, %v1280, 0.0
  %v1285 = vadd.f32 %v1283, %v1284
  %v1286 = vsel %vm365, %v1281, 0.0
  %v1287 = vadd.f32 %v1285, %v1286
  %v1288 = vsel %vm365, %v1282, 0.0
  %v1289 = vadd.f32 %v1287, %v1288
  %v1290 = vrot.slane %v1289, 4
  %v1291 = vadd.f32 %v1289, %v1290
  %v1292 = vrot.slane %v1291, 2
  %v1293 = vadd.f32 %v1291, %v1292
  %v1294 = vrot.slane %v1293, 1
  %v1295 = vadd.f32 %v1293, %v1294
  %v1296 = vmax.f32 %v1245, %v1248
  %v1297 = vmax.f32 %v1251, %v1254
  %v1298 = vmax.f32 %v1296, %v1297
  %v1299 = vrot.slane %v1298, 4
  %v1300 = vmax.f32 %v1298, %v1299
  %v1301 = vrot.slane %v1300, 2
  %v1302 = vmax.f32 %v1300, %v1301
  %v1303 = vrot.slane %v1302, 1
  %v1304 = vmax.f32 %v1302, %v1303
  %v1305 = vadd.f32 %v1265, %v1304
  %v1306 = vadd.f32 %v1268, %v1304
  %v1307 = vadd.f32 %v1271, %v1304
  %v1308 = vadd.f32 %v1274, %v1304
  %v1309 = vmul.f32 %v1305, 0.2
  %v1310 = vmul.f32 %v1306, 0.2
  %v1311 = vmul.f32 %v1307, 0.2
  %v1312 = vmul.f32 %v1308, 0.2
  %v1313 = vmax.f32 %v1305, %v1309
  %v1314 = vmax.f32 %v1306, %v1310
  %v1315 = vmax.f32 %v1307, %v1311
  %v1316 = vmax.f32 %v1308, %v1312
  %v1317 = vadd.f32 %v1265, %v1295
  %v1318 = vadd.f32 %v1268, %v1295
  %v1319 = vadd.f32 %v1271, %v1295
  %v1320 = vadd.f32 %v1274, %v1295
  %v1321 = vmul.f32 %v1317, 0.2
  %v1322 = vmul.f32 %v1318, 0.2
  %v1323 = vmul.f32 %v1319, 0.2
  %v1324 = vmul.f32 %v1320, 0.2
  %v1325 = vmax.f32 %v1317, %v1321
  %v1326 = vmax.f32 %v1318, %v1322
  %v1327 = vmax.f32 %v1319, %v1323
  %v1328 = vmax.f32 %v1320, %v1324
  %v1329 = vsub.f32 %v1325, %v1313
  %v1330 = vsub.f32 %v1326, %v1314
  %v1331 = vsub.f32 %v1327, %v1315
  %v1332 = vsub.f32 %v1328, %v1316
  %v1333 = vmul.f32 %v1329, 1.442695
  %v1334 = vpow.pop %v1333
  %v1335 = vmul.f32 %v1330, 1.442695
  %v1336 = vpow.pop %v1335
  %v1337 = vmul.f32 %v1331, 1.442695
  %v1338 = vpow.pop %v1337
  %v1339 = vmul.f32 %v1332, 1.442695
  %v1340 = vpow.pop %v1339
  %v1341 = vmul.f32 %v1334, %v61
  %v1342 = vmul.f32 %v1336, %v62
  %v1343 = vmul.f32 %v1338, %v63
  %v1344 = vmul.f32 %v1340, %v64
  %v1345 = vsel %vm365, %v1341, 0.0
  %1346 = vadd.xlane.f32.xlu0 %v1345
  %v1347 = vpop.xlane.xlu0 %1346
  %v1348 = vsel %vm365, %v1342, 0.0
  %1349 = vadd.xlane.f32.xlu0 %v1348
  %v1350 = vpop.xlane.xlu0 %1349
  %v1351 = vsel %vm365, %v1343, 0.0
  %1352 = vadd.xlane.f32.xlu0 %v1351
  %v1353 = vpop.xlane.xlu0 %1352
  %v1354 = vsel %vm365, %v1344, 0.0
  %1355 = vadd.xlane.f32.xlu0 %v1354
  %v1356 = vpop.xlane.xlu0 %1355
  %v1357 = vpack.c.bf16 %v1342, %v1341
  %v1358 = vpack.c.bf16 %v1344, %v1343
  %v1359 = vpack.c.bf16 %v1228, %v1226
  %v1360 = vpack.c.bf16 %v1233, %v1231
  %v1362 = vsel %vm365, %v1357, 0
  %v1365 = vsel %vm365, %v1358, 0
  %1367 = vmatpush.bf16.msra.mxu0 0
  %1368 = vmatpush.bf16.msra.mxu0 0
  %1369 = vmatpush.bf16.msra.mxu0 0
  %1370 = vmatpush.bf16.msra.mxu0 0
  %1371 = vmatpush.bf16.msra.mxu0 0
  %1372 = vmatpush.bf16.msra.mxu0 0
  %1373 = vmatpush.bf16.msra.mxu0 %v1360
  %1374 = vmatpush.bf16.msra.mxu0 %v1359
  %1375 = vmatmul.bf16.gmra.mxu0 %v1362
  %v1376 = vpop.f32.mrf.mxu0
  %v1377 = vadd.f32 0.0, %v1376
  %v1378 = vpop.f32.mrf.mxu0
  %v1379 = vadd.f32 0.0, %v1378
  %1380 = vmatmul.bf16.gmra.mxu0 %v1365
  %v1381 = vpop.f32.mrf.mxu0
  %v1382 = vadd.f32 0.0, %v1381
  %v1383 = vpop.f32.mrf.mxu0
  %v1384 = vadd.f32 0.0, %v1383
  %1385 = vdwg.mxu0
  %v1386 = vrcp.pop %v1347
  %v1387 = vrcp.pop %v1350
  %v1388 = vrcp.pop %v1353
  %v1389 = vrcp.pop %v1356
  %v1390 = vmul.f32 %v1377, %v1386
  %v1391 = vmul.f32 %v1379, %v1387
  %v1392 = vmul.f32 %v1382, %v1388
  %v1393 = vmul.f32 %v1384, %v1389
  %v1394 = vld [vmem:[%s16] sm:$0x1]
  %v1396 = vperm.slane %v1394, 0
  %v1398 = vadd.f32 %v1390, %v1396
  %v1399 = vadd.f32 %v1391, %v1396
  %v1400 = vadd.f32 %v1392, %v1396
  %v1401 = vadd.f32 %v1393, %v1396
  %vm1402 = vcmask 56320
  %v1403 = vsel %vm1402, %v1398, -inf
  %1404 = vmax.xlane.f32.xlu0 %v1403
  %v1405 = vpop.xlane.xlu0 %1404
  %v1406 = vsel %vm1402, %v1399, -inf
  %1407 = vmax.xlane.f32.xlu0 %v1406
  %v1408 = vpop.xlane.xlu0 %1407
  %v1409 = vsel %vm1402, %v1400, -inf
  %1410 = vmax.xlane.f32.xlu0 %v1409
  %v1411 = vpop.xlane.xlu0 %1410
  %v1412 = vsel %vm1402, %v1401, -inf
  %1413 = vmax.xlane.f32.xlu0 %v1412
  %v1414 = vpop.xlane.xlu0 %1413
  %v1415 = vsub.f32 %v1398, %v1405
  %v1416 = vsub.f32 %v1399, %v1408
  %v1417 = vsub.f32 %v1400, %v1411
  %v1418 = vsub.f32 %v1401, %v1414
  %v1419 = vmul.f32 %v1415, 1.442695
  %v1420 = vpow.pop %v1419
  %v1421 = vmul.f32 %v1416, 1.442695
  %v1422 = vpow.pop %v1421
  %v1423 = vmul.f32 %v1417, 1.442695
  %v1424 = vpow.pop %v1423
  %v1425 = vmul.f32 %v1418, 1.442695
  %v1426 = vpow.pop %v1425
  %v1427 = vsel %vm1402, %v1420, 0.0
  %1428 = vadd.xlane.f32.xlu0 %v1427
  %v1429 = vpop.xlane.xlu0 %1428
  %v1430 = vsel %vm1402, %v1422, 0.0
  %1431 = vadd.xlane.f32.xlu0 %v1430
  %v1432 = vpop.xlane.xlu0 %1431
  %v1433 = vsel %vm1402, %v1424, 0.0
  %1434 = vadd.xlane.f32.xlu0 %v1433
  %v1435 = vpop.xlane.xlu0 %1434
  %v1436 = vsel %vm1402, %v1426, 0.0
  %1437 = vadd.xlane.f32.xlu0 %v1436
  %v1438 = vpop.xlane.xlu0 %1437
  %v1439 = vlog2.pop %v1429
  %v1440 = vmul.f32 %v1439, 0.6931472
  %v1441 = vlog2.pop %v1432
  %v1442 = vmul.f32 %v1441, 0.6931472
  %v1443 = vlog2.pop %v1435
  %v1444 = vmul.f32 %v1443, 0.6931472
  %v1445 = vlog2.pop %v1438
  %v1446 = vmul.f32 %v1445, 0.6931472
  %v1447 = vsub.f32 %v1415, %v1440
  %v1448 = vsub.f32 %v1416, %v1442
  %v1449 = vsub.f32 %v1417, %v1444
  %v1450 = vsub.f32 %v1418, %v1446
  %1451 = vst.msk [vmem:[%s17] sm:$0xff] %vm1402, %v1447
  %1452 = vst.msk [vmem:[%s17 + $0x8] sm:$0xff] %vm1402, %v1448
  %1453 = vst.msk [vmem:[%s17 + $0x10] sm:$0xff] %vm1402, %v1449
  %1454 = vst.msk [vmem:[%s17 + $0x18] sm:$0xff] %vm1402, %v1450
  // Predicated region
  $region70: #{gat_forward.1} parent=0 // pred_check
    _
  $region71: #{gat_forward.1} parent=0 // pred_check_branch
    %1456 = sbr.rel (0) target = $region73
  $region72: #{gat_forward.1} parent=0 // pred_region
    _
  $region73: #{gat_forward.1} parent=0 // pred_fallthru
    _
  // Predicated region
  $region74: #{gat_forward.1} parent=0 // pred_check
    _
  $region75: #{gat_forward.1} parent=0 // pred_check_branch
    %1458 = sbr.rel (0) target = $region77
  $region76: #{gat_forward.1} parent=0 // pred_region
    _
  $region77: #{gat_forward.1} parent=0 // pred_fallthru
    _

</llo_original>
